<compile_context>
chip_gen: v7x
topology: tpu7x:2x2x1
jax: 0.10.0
libtpu: 0.0.40
codegen_flags: <defaults>
</compile_context>

<pallas_src>
import jax
import jax.numpy as jnp
from jax import lax
from jax.experimental import pallas as pl
from jax.experimental.pallas import tpu as pltpu


def _layernorm(v, gamma, beta, eps=1e-5):
    # PyTorch LayerNorm: biased variance, eps inside rsqrt.
    mu = jnp.mean(v, axis=-1, keepdims=True)
    var = jnp.mean((v - mu) ** 2, axis=-1, keepdims=True)
    return (v - mu) * lax.rsqrt(var + eps) * gamma + beta


def _gelu_exact(v):
    # nn.GELU() default: 0.5 * x * (1 + erf(x / sqrt(2)))
    return 0.5 * v * (1.0 + lax.erf(v * jnp.float32(0.7071067811865476)))


def mixer_block_kernel(
    x_ref,
    g1_ref, be1_ref,            # pre-token LayerNorm (1, D) f32
    w1_ref, b1_ref,             # token Linear(S -> C): (C, S) bf16, (C, 1) f32
    w2_ref, b2_ref,             # token Linear(C -> S): (S, C) bf16, (S, 1) f32
    g2_ref, be2_ref,            # pre-channel LayerNorm (1, D) f32
    w3_ref, b3_ref,             # channel Linear(D -> SH): (D, SH) bf16, (1, SH) f32
    w4_ref, b4_ref,             # channel Linear(SH -> D): (SH, D) bf16, (1, D) f32
    out_ref,
):
    # Hoist all parameter loads once (JAX does not CSE broadcast_in_dim; keep
    # these out of any future inner-loop restructuring).
    g1, be1 = g1_ref[...], be1_ref[...]
    g2, be2 = g2_ref[...], be2_ref[...]
    w1, b1 = w1_ref[...], b1_ref[...]
    w2, b2 = w2_ref[...], b2_ref[...]
    w3, b3 = w3_ref[...], b3_ref[...]
    w4, b4 = w4_ref[...], b4_ref[...]

    x = x_ref[0].astype(jnp.float32)                        # (S, D)

    # ---- token-mixing branch (transposed orientation, no .T anywhere) ----
    ln_x = _layernorm(x, g1, be1)                           # (S, D) f32
    # h_t[c, d] = sum_s W1[c, s] * ln_x[s, d] + b1[c]
    h_t = jnp.dot(w1, ln_x.astype(jnp.bfloat16),
                  preferred_element_type=jnp.float32) + b1  # (C, D) f32
    h_t = _gelu_exact(h_t)
    # tok[s, d] = sum_c W2[s, c] * h_t[c, d] + b2[s]
    tok = jnp.dot(w2, h_t.astype(jnp.bfloat16),
                  preferred_element_type=jnp.float32) + b2  # (S, D) f32
    u = tok + x                                             # residual 1 (f32)

    # ---- channel-mixing branch ------------------------------------------
    ln_u = _layernorm(u, g2, be2)                           # (S, D) f32
    h2 = _gelu_exact(
        jnp.dot(ln_u.astype(jnp.bfloat16), w3,
                preferred_element_type=jnp.float32) + b3)   # (S, SH) f32
    ch = jnp.dot(h2.astype(jnp.bfloat16), w4,
                 preferred_element_type=jnp.float32) + b4   # (S, D) f32

    out_ref[0] = (ch + u).astype(out_ref.dtype)


def _vmem_limit_bytes(S, D, C, SH):
    weights = 2 * (2 * S * C + 2 * D * SH)        # bf16 weights, single copy
    small = 4 * (4 * D + C + S + SH)              # f32 LN params + biases
    io = 2 * 2 * (S * D * 4)                      # x / out tiles, double-buffered
    inter = 4 * (3 * S * D + C * D + S * SH)      # f32 intermediates (rough)
    need = weights + small + io + inter
    # 2x headroom for compiler temporaries; clamp to [32 MiB, 64 MiB] so the
    # value is valid on every generation (v7x physical VMEM is 64 MiB).
    return int(min(max(2 * need, 32 * 1024 * 1024), 64 * 1024 * 1024))


def _build_mixer_call(B, S, D, C, SH, out_dtype, *, single_buffer_weights):
    def const(shape):
        idx = lambda b: (0,) * len(shape)
        if single_buffer_weights:
            # constant index map -> fetched once; one VMEM copy is enough
            return pl.BlockSpec(shape, idx, pipeline_mode=pl.Buffered(1))
        return pl.BlockSpec(shape, idx)

    in_specs = [
        pl.BlockSpec((1, S, D), lambda b: (b, 0, 0)),   # x
        const((1, D)), const((1, D)),                   # ln gamma / beta
        const((C, S)), const((C, 1)),                   # token W1 / b1
        const((S, C)), const((S, 1)),                   # token W2 / b2
        const((1, D)), const((1, D)),                   # channel LN gamma/beta
        const((D, SH)), const((1, SH)),                 # channel W3 / b3
        const((SH, D)), const((1, D)),                  # channel W4 / b4
    ]
    out_spec = pl.BlockSpec((1, S, D), lambda b: (b, 0, 0))

    flops = 4 * B * S * D * (C + SH)
    transcendentals = B * (C * D + S * SH)
    bytes_accessed = (2 * (2 * S * C + 2 * D * SH)
                      + 4 * (4 * D + C + S + SH)
                      + 2 * B * S * D * 4)

    return pl.pallas_call(
        mixer_block_kernel,
        out_shape=jax.ShapeDtypeStruct((B, S, D), out_dtype),
        grid_spec=pltpu.PrefetchScalarGridSpec(
            num_scalar_prefetch=0,
            grid=(B,),
            in_specs=in_specs,
            out_specs=out_spec,
        ),
        compiler_params=pltpu.CompilerParams(
            dimension_semantics=("parallel",),
            vmem_limit_bytes=_vmem_limit_bytes(S, D, C, SH),
        ),
        cost_estimate=pl.CostEstimate(
            flops=flops,
            transcendentals=transcendentals,
            bytes_accessed=bytes_accessed,
        ),
    )


def mixer_block(x, params):
    """x: (B, S, D) float32.  params: dict of weights (see init_params)."""
    B, S, D = x.shape
    C = params["w1"].shape[0]     # c_hidden
    SH = params["w3"].shape[1]    # s_hidden
    args = (
        x,
        params["g1"], params["be1"],
        params["w1"], params["b1"],
        params["w2"], params["b2"],
        params["g2"], params["be2"],
        params["w3"], params["b3"],
        params["w4"], params["b4"],
    )
    # Prefer single-buffered weights (halves resident weight VMEM).  If this
    # jax version rejects pl.Buffered(1), fall back to default buffering —
    # the kernel body is identical in both paths.
    try:
        fn = _build_mixer_call(B, S, D, C, SH, x.dtype,
                               single_buffer_weights=True)
        return jax.block_until_ready(fn(*args))
    except Exception:
        fn = _build_mixer_call(B, S, D, C, SH, x.dtype,
                               single_buffer_weights=False)
        return fn(*args)


def init_params(key, hidden_dim, seq_length, c_hidden, s_hidden):
    """Deterministic init mirroring the PyTorch module's parameter shapes.

    Token-mixing weights are stored in PyTorch's (out_features, in_features)
    layout; channel-mixing weights are stored transposed (in, out) for x @ W.
    Weights are bf16 (matmul operands); biases / LN params stay f32.
    """
    ks = jax.random.split(key, 4)

    def lin(k, fan_in, w_shape, b_shape):
        # torch.nn.Linear default: U(-1/sqrt(fan_in), 1/sqrt(fan_in))
        bound = 1.0 / jnp.sqrt(jnp.float32(fan_in))
        kw, kb = jax.random.split(k)
        w = jax.random.uniform(kw, w_shape, jnp.float32, -bound, bound)
        b = jax.random.uniform(kb, b_shape, jnp.float32, -bound, bound)
        return w.astype(jnp.bfloat16), b

    w1, b1 = lin(ks[0], seq_length, (c_hidden, seq_length), (c_hidden, 1))
    w2, b2 = lin(ks[1], c_hidden, (seq_length, c_hidden), (seq_length, 1))
    w3, b3 = lin(ks[2], hidden_dim, (hidden_dim, s_hidden), (1, s_hidden))
    w4, b4 = lin(ks[3], s_hidden, (s_hidden, hidden_dim), (1, hidden_dim))

    return {
        "g1": jnp.ones((1, hidden_dim), jnp.float32),
        "be1": jnp.zeros((1, hidden_dim), jnp.float32),
        "w1": w1, "b1": b1, "w2": w2, "b2": b2,
        "g2": jnp.ones((1, hidden_dim), jnp.float32),
        "be2": jnp.zeros((1, hidden_dim), jnp.float32),
        "w3": w3, "b3": b3, "w4": w4, "b4": b4,
    }


def mixer_block_ref(x, p):
    """Pure-JAX reference with identical bf16-operand / f32-accum math."""
    x = x.astype(jnp.float32)
    ln_x = _layernorm(x, p["g1"], p["be1"])
    h = jnp.einsum("cs,bsd->bcd", p["w1"], ln_x.astype(jnp.bfloat16),
                   preferred_element_type=jnp.float32) + p["b1"]
    h = _gelu_exact(h)
    tok = jnp.einsum("sc,bcd->bsd", p["w2"], h.astype(jnp.bfloat16),
                     preferred_element_type=jnp.float32) + p["b2"]
    u = tok + x
    ln_u = _layernorm(u, p["g2"], p["be2"])
    h2 = _gelu_exact(jnp.einsum("bsd,dh->bsh", ln_u.astype(jnp.bfloat16),
                                p["w3"], preferred_element_type=jnp.float32)
                     + p["b3"])
    ch = jnp.einsum("bsh,hd->bsd", h2.astype(jnp.bfloat16), p["w4"],
                    preferred_element_type=jnp.float32) + p["b4"]
    return ch + u


if __name__ == "__main__":
    # small shapes consistent with the module: (B, seq_length, hidden_dim)
    B, S, D = 2, 8, 32
    C_HIDDEN, S_HIDDEN = 16, 64

    key = jax.random.PRNGKey(0)
    kx, kp = jax.random.split(key)
    x = jax.random.normal(kx, (B, S, D), jnp.float32)
    params = init_params(kp, D, S, C_HIDDEN, S_HIDDEN)

    out = jax.block_until_ready(mixer_block(x, params))
    ref = mixer_block_ref(x, params)

    assert out.shape == (B, S, D)
    err = float(jnp.max(jnp.abs(out - ref)))
    assert err < 3e-3, err

    print("KERNEL_OK")
</pallas_src>

<mosaic_0001>
module attributes {stable_mosaic.version = 11 : i64} {
  func.func @mixer_block_kernel(%arg0: i32, %arg1: memref<1x8x32xf32, #tpu.memory_space<vmem>>, %arg2: memref<1x32xf32, #tpu.memory_space<vmem>>, %arg3: memref<1x32xf32, #tpu.memory_space<vmem>>, %arg4: memref<16x8xbf16, #tpu.memory_space<vmem>>, %arg5: memref<16x1xf32, #tpu.memory_space<vmem>>, %arg6: memref<8x16xbf16, #tpu.memory_space<vmem>>, %arg7: memref<8x1xf32, #tpu.memory_space<vmem>>, %arg8: memref<1x32xf32, #tpu.memory_space<vmem>>, %arg9: memref<1x32xf32, #tpu.memory_space<vmem>>, %arg10: memref<32x64xbf16, #tpu.memory_space<vmem>>, %arg11: memref<1x64xf32, #tpu.memory_space<vmem>>, %arg12: memref<64x32xbf16, #tpu.memory_space<vmem>>, %arg13: memref<1x32xf32, #tpu.memory_space<vmem>>, %arg14: memref<1x8x32xf32, #tpu.memory_space<vmem>>) attributes {dimension_semantics = [#tpu.dimension_semantics<parallel>], iteration_bounds = array<i64: 2>, scalar_prefetch = 0 : i64, scratch_operands = 0 : i64, tpu.core_type = #tpu.core_type<tc>, window_params = [{transform_indices = @transform_0, window_bounds = array<i64: 1, 8, 32>}, {pipeline_mode = #tpu.pipeline_mode<synchronous>, transform_indices = @transform_1, window_bounds = array<i64: 1, 32>}, {pipeline_mode = #tpu.pipeline_mode<synchronous>, transform_indices = @transform_2, window_bounds = array<i64: 1, 32>}, {pipeline_mode = #tpu.pipeline_mode<synchronous>, transform_indices = @transform_3, window_bounds = array<i64: 16, 8>}, {pipeline_mode = #tpu.pipeline_mode<synchronous>, transform_indices = @transform_4, window_bounds = array<i64: 16, 1>}, {pipeline_mode = #tpu.pipeline_mode<synchronous>, transform_indices = @transform_5, window_bounds = array<i64: 8, 16>}, {pipeline_mode = #tpu.pipeline_mode<synchronous>, transform_indices = @transform_6, window_bounds = array<i64: 8, 1>}, {pipeline_mode = #tpu.pipeline_mode<synchronous>, transform_indices = @transform_7, window_bounds = array<i64: 1, 32>}, {pipeline_mode = #tpu.pipeline_mode<synchronous>, transform_indices = @transform_8, window_bounds = array<i64: 1, 32>}, {pipeline_mode = #tpu.pipeline_mode<synchronous>, transform_indices = @transform_9, window_bounds = array<i64: 32, 64>}, {pipeline_mode = #tpu.pipeline_mode<synchronous>, transform_indices = @transform_10, window_bounds = array<i64: 1, 64>}, {pipeline_mode = #tpu.pipeline_mode<synchronous>, transform_indices = @transform_11, window_bounds = array<i64: 64, 32>}, {pipeline_mode = #tpu.pipeline_mode<synchronous>, transform_indices = @transform_12, window_bounds = array<i64: 1, 32>}, {transform_indices = @transform_13, window_bounds = array<i64: 1, 8, 32>}]} {
    %c0 = arith.constant 0 : index
    %c0_0 = arith.constant 0 : index
    %0 = vector.load %arg2[%c0, %c0_0] : memref<1x32xf32, #tpu.memory_space<vmem>>, vector<1x32xf32>
    %c0_1 = arith.constant 0 : index
    %c0_2 = arith.constant 0 : index
    %1 = vector.load %arg3[%c0_1, %c0_2] : memref<1x32xf32, #tpu.memory_space<vmem>>, vector<1x32xf32>
    %c0_3 = arith.constant 0 : index
    %c0_4 = arith.constant 0 : index
    %2 = vector.load %arg8[%c0_3, %c0_4] : memref<1x32xf32, #tpu.memory_space<vmem>>, vector<1x32xf32>
    %c0_5 = arith.constant 0 : index
    %c0_6 = arith.constant 0 : index
    %3 = vector.load %arg9[%c0_5, %c0_6] : memref<1x32xf32, #tpu.memory_space<vmem>>, vector<1x32xf32>
    %c0_7 = arith.constant 0 : index
    %c0_8 = arith.constant 0 : index
    %4 = vector.load %arg4[%c0_7, %c0_8] : memref<16x8xbf16, #tpu.memory_space<vmem>>, vector<16x8xbf16>
    %c0_9 = arith.constant 0 : index
    %c0_10 = arith.constant 0 : index
    %5 = vector.load %arg5[%c0_9, %c0_10] : memref<16x1xf32, #tpu.memory_space<vmem>>, vector<16x1xf32>
    %c0_11 = arith.constant 0 : index
    %c0_12 = arith.constant 0 : index
    %6 = vector.load %arg6[%c0_11, %c0_12] : memref<8x16xbf16, #tpu.memory_space<vmem>>, vector<8x16xbf16>
    %c0_13 = arith.constant 0 : index
    %c0_14 = arith.constant 0 : index
    %7 = vector.load %arg7[%c0_13, %c0_14] : memref<8x1xf32, #tpu.memory_space<vmem>>, vector<8x1xf32>
    %c0_15 = arith.constant 0 : index
    %c0_16 = arith.constant 0 : index
    %8 = vector.load %arg10[%c0_15, %c0_16] : memref<32x64xbf16, #tpu.memory_space<vmem>>, vector<32x64xbf16>
    %c0_17 = arith.constant 0 : index
    %c0_18 = arith.constant 0 : index
    %9 = vector.load %arg11[%c0_17, %c0_18] : memref<1x64xf32, #tpu.memory_space<vmem>>, vector<1x64xf32>
    %c0_19 = arith.constant 0 : index
    %c0_20 = arith.constant 0 : index
    %10 = vector.load %arg12[%c0_19, %c0_20] : memref<64x32xbf16, #tpu.memory_space<vmem>>, vector<64x32xbf16>
    %c0_21 = arith.constant 0 : index
    %c0_22 = arith.constant 0 : index
    %11 = vector.load %arg13[%c0_21, %c0_22] : memref<1x32xf32, #tpu.memory_space<vmem>>, vector<1x32xf32>
    %c0_23 = arith.constant 0 : index
    %c0_24 = arith.constant 0 : index
    %c0_25 = arith.constant 0 : index
    %12 = vector.load %arg1[%c0_23, %c0_24, %c0_25] : memref<1x8x32xf32, #tpu.memory_space<vmem>>, vector<1x8x32xf32>
    %13 = vector.shape_cast %12 : vector<1x8x32xf32> to vector<8x32xf32>
    %cst = arith.constant dense<0.000000e+00> : vector<8xf32>
    %14 = vector.multi_reduction <add>, %13, %cst [1] : vector<8x32xf32> to vector<8xf32>
    %15 = vector.shape_cast %14 : vector<8xf32> to vector<8x1xf32>
    %cst_26 = arith.constant 3.200000e+01 : f32
    %16 = vector.broadcast %cst_26 : f32 to vector<8x1xf32>
    %17 = arith.divf %15, %16 : vector<8x1xf32>
    %18 = vector.broadcast %17 : vector<8x1xf32> to vector<8x32xf32>
    %19 = arith.subf %13, %18 : vector<8x32xf32>
    %20 = arith.mulf %19, %19 : vector<8x32xf32>
    %cst_27 = arith.constant dense<0.000000e+00> : vector<8xf32>
    %21 = vector.multi_reduction <add>, %20, %cst_27 [1] : vector<8x32xf32> to vector<8xf32>
    %22 = vector.shape_cast %21 : vector<8xf32> to vector<8x1xf32>
    %cst_28 = arith.constant 3.200000e+01 : f32
    %23 = vector.broadcast %cst_28 : f32 to vector<8x1xf32>
    %24 = arith.divf %22, %23 : vector<8x1xf32>
    %25 = vector.broadcast %17 : vector<8x1xf32> to vector<8x32xf32>
    %26 = arith.subf %13, %25 : vector<8x32xf32>
    %cst_29 = arith.constant 9.99999974E-6 : f32
    %27 = vector.broadcast %cst_29 : f32 to vector<8x1xf32>
    %28 = arith.addf %24, %27 : vector<8x1xf32>
    %29 = math.rsqrt %28 : vector<8x1xf32>
    %30 = vector.broadcast %29 : vector<8x1xf32> to vector<8x32xf32>
    %31 = arith.mulf %26, %30 : vector<8x32xf32>
    %32 = vector.broadcast %0 : vector<1x32xf32> to vector<8x32xf32>
    %33 = arith.mulf %31, %32 : vector<8x32xf32>
    %34 = vector.broadcast %1 : vector<1x32xf32> to vector<8x32xf32>
    %35 = arith.addf %33, %34 : vector<8x32xf32>
    %36 = arith.truncf %35 : vector<8x32xf32> to vector<8x32xbf16>
    %cst_30 = arith.constant dense<0.000000e+00> : vector<16x32xf32>
    %37 = tpu.matmul %4, %36, %cst_30 {dimension_numbers = #tpu.dot_dimension_numbers<[1], [0], [0], [1], [0, 0, 1, 1], [], []>} : vector<16x8xbf16>, vector<8x32xbf16>, vector<16x32xf32> -> vector<16x32xf32>
    %38 = vector.broadcast %5 : vector<16x1xf32> to vector<16x32xf32>
    %39 = arith.addf %37, %38 : vector<16x32xf32>
    %cst_31 = arith.constant 5.000000e-01 : f32
    %40 = vector.broadcast %cst_31 : f32 to vector<16x32xf32>
    %41 = arith.mulf %40, %39 : vector<16x32xf32>
    %cst_32 = arith.constant 0.707106769 : f32
    %42 = vector.broadcast %cst_32 : f32 to vector<16x32xf32>
    %43 = arith.mulf %39, %42 : vector<16x32xf32>
    %44 = math.erf %43 : vector<16x32xf32>
    %cst_33 = arith.constant 1.000000e+00 : f32
    %45 = vector.broadcast %cst_33 : f32 to vector<16x32xf32>
    %46 = arith.addf %45, %44 : vector<16x32xf32>
    %47 = arith.mulf %41, %46 : vector<16x32xf32>
    %48 = arith.truncf %47 : vector<16x32xf32> to vector<16x32xbf16>
    %cst_34 = arith.constant dense<0.000000e+00> : vector<8x32xf32>
    %49 = tpu.matmul %6, %48, %cst_34 {dimension_numbers = #tpu.dot_dimension_numbers<[1], [0], [0], [1], [0, 0, 1, 1], [], []>} : vector<8x16xbf16>, vector<16x32xbf16>, vector<8x32xf32> -> vector<8x32xf32>
    %50 = vector.broadcast %7 : vector<8x1xf32> to vector<8x32xf32>
    %51 = arith.addf %49, %50 : vector<8x32xf32>
    %52 = arith.addf %51, %13 : vector<8x32xf32>
    %cst_35 = arith.constant dense<0.000000e+00> : vector<8xf32>
    %53 = vector.multi_reduction <add>, %52, %cst_35 [1] : vector<8x32xf32> to vector<8xf32>
    %54 = vector.shape_cast %53 : vector<8xf32> to vector<8x1xf32>
    %cst_36 = arith.constant 3.200000e+01 : f32
    %55 = vector.broadcast %cst_36 : f32 to vector<8x1xf32>
    %56 = arith.divf %54, %55 : vector<8x1xf32>
    %57 = vector.broadcast %56 : vector<8x1xf32> to vector<8x32xf32>
    %58 = arith.subf %52, %57 : vector<8x32xf32>
    %59 = arith.mulf %58, %58 : vector<8x32xf32>
    %cst_37 = arith.constant dense<0.000000e+00> : vector<8xf32>
    %60 = vector.multi_reduction <add>, %59, %cst_37 [1] : vector<8x32xf32> to vector<8xf32>
    %61 = vector.shape_cast %60 : vector<8xf32> to vector<8x1xf32>
    %cst_38 = arith.constant 3.200000e+01 : f32
    %62 = vector.broadcast %cst_38 : f32 to vector<8x1xf32>
    %63 = arith.divf %61, %62 : vector<8x1xf32>
    %64 = vector.broadcast %56 : vector<8x1xf32> to vector<8x32xf32>
    %65 = arith.subf %52, %64 : vector<8x32xf32>
    %cst_39 = arith.constant 9.99999974E-6 : f32
    %66 = vector.broadcast %cst_39 : f32 to vector<8x1xf32>
    %67 = arith.addf %63, %66 : vector<8x1xf32>
    %68 = math.rsqrt %67 : vector<8x1xf32>
    %69 = vector.broadcast %68 : vector<8x1xf32> to vector<8x32xf32>
    %70 = arith.mulf %65, %69 : vector<8x32xf32>
    %71 = vector.broadcast %2 : vector<1x32xf32> to vector<8x32xf32>
    %72 = arith.mulf %70, %71 : vector<8x32xf32>
    %73 = vector.broadcast %3 : vector<1x32xf32> to vector<8x32xf32>
    %74 = arith.addf %72, %73 : vector<8x32xf32>
    %75 = arith.truncf %74 : vector<8x32xf32> to vector<8x32xbf16>
    %cst_40 = arith.constant dense<0.000000e+00> : vector<8x64xf32>
    %76 = tpu.matmul %75, %8, %cst_40 {dimension_numbers = #tpu.dot_dimension_numbers<[1], [0], [0], [1], [0, 0, 1, 1], [], []>} : vector<8x32xbf16>, vector<32x64xbf16>, vector<8x64xf32> -> vector<8x64xf32>
    %77 = vector.broadcast %9 : vector<1x64xf32> to vector<8x64xf32>
    %78 = arith.addf %76, %77 : vector<8x64xf32>
    %cst_41 = arith.constant 5.000000e-01 : f32
    %79 = vector.broadcast %cst_41 : f32 to vector<8x64xf32>
    %80 = arith.mulf %79, %78 : vector<8x64xf32>
    %cst_42 = arith.constant 0.707106769 : f32
    %81 = vector.broadcast %cst_42 : f32 to vector<8x64xf32>
    %82 = arith.mulf %78, %81 : vector<8x64xf32>
    %83 = math.erf %82 : vector<8x64xf32>
    %cst_43 = arith.constant 1.000000e+00 : f32
    %84 = vector.broadcast %cst_43 : f32 to vector<8x64xf32>
    %85 = arith.addf %84, %83 : vector<8x64xf32>
    %86 = arith.mulf %80, %85 : vector<8x64xf32>
    %87 = arith.truncf %86 : vector<8x64xf32> to vector<8x64xbf16>
    %cst_44 = arith.constant dense<0.000000e+00> : vector<8x32xf32>
    %88 = tpu.matmul %87, %10, %cst_44 {dimension_numbers = #tpu.dot_dimension_numbers<[1], [0], [0], [1], [0, 0, 1, 1], [], []>} : vector<8x64xbf16>, vector<64x32xbf16>, vector<8x32xf32> -> vector<8x32xf32>
    %89 = vector.broadcast %11 : vector<1x32xf32> to vector<8x32xf32>
    %90 = arith.addf %88, %89 : vector<8x32xf32>
    %91 = arith.addf %90, %52 : vector<8x32xf32>
    %c0_45 = arith.constant 0 : index
    %c0_46 = arith.constant 0 : index
    %c0_47 = arith.constant 0 : index
    %92 = vector.load %arg14[%c0_45, %c0_46, %c0_47] : memref<1x8x32xf32, #tpu.memory_space<vmem>>, vector<1x8x32xf32>
    %93 = vector.shape_cast %92 : vector<1x8x32xf32> to vector<8x32xf32>
    %94 = vector.shape_cast %91 : vector<8x32xf32> to vector<1x8x32xf32>
    tpu.vector_store %arg14[%c0_45, %c0_46, %c0_47], %94 {strides = array<i32>} : memref<1x8x32xf32, #tpu.memory_space<vmem>>, vector<1x8x32xf32>,
    return
  }
  func.func @transform_0(%arg0: i32) -> (i32, i32, i32) {
    %c0_i32 = arith.constant 0 : i32
    %c0_i32_0 = arith.constant 0 : i32
    %c0_i32_1 = arith.constant 0 : i32
    return %arg0, %c0_i32, %c0_i32_0 : i32, i32, i32
  }
  func.func @transform_1(%arg0: i32) -> (i32, i32) {
    %c0_i32 = arith.constant 0 : i32
    %c0_i32_0 = arith.constant 0 : i32
    %c0_i32_1 = arith.constant 0 : i32
    return %c0_i32, %c0_i32_0 : i32, i32
  }
  func.func @transform_2(%arg0: i32) -> (i32, i32) {
    %c0_i32 = arith.constant 0 : i32
    %c0_i32_0 = arith.constant 0 : i32
    %c0_i32_1 = arith.constant 0 : i32
    return %c0_i32, %c0_i32_0 : i32, i32
  }
  func.func @transform_3(%arg0: i32) -> (i32, i32) {
    %c0_i32 = arith.constant 0 : i32
    %c0_i32_0 = arith.constant 0 : i32
    %c0_i32_1 = arith.constant 0 : i32
    return %c0_i32, %c0_i32_0 : i32, i32
  }
  func.func @transform_4(%arg0: i32) -> (i32, i32) {
    %c0_i32 = arith.constant 0 : i32
    %c0_i32_0 = arith.constant 0 : i32
    %c0_i32_1 = arith.constant 0 : i32
    return %c0_i32, %c0_i32_0 : i32, i32
  }
  func.func @transform_5(%arg0: i32) -> (i32, i32) {
    %c0_i32 = arith.constant 0 : i32
    %c0_i32_0 = arith.constant 0 : i32
    %c0_i32_1 = arith.constant 0 : i32
    return %c0_i32, %c0_i32_0 : i32, i32
  }
  func.func @transform_6(%arg0: i32) -> (i32, i32) {
    %c0_i32 = arith.constant 0 : i32
    %c0_i32_0 = arith.constant 0 : i32
    %c0_i32_1 = arith.constant 0 : i32
    return %c0_i32, %c0_i32_0 : i32, i32
  }
  func.func @transform_7(%arg0: i32) -> (i32, i32) {
    %c0_i32 = arith.constant 0 : i32
    %c0_i32_0 = arith.constant 0 : i32
    %c0_i32_1 = arith.constant 0 : i32
    return %c0_i32, %c0_i32_0 : i32, i32
  }
  func.func @transform_8(%arg0: i32) -> (i32, i32) {
    %c0_i32 = arith.constant 0 : i32
    %c0_i32_0 = arith.constant 0 : i32
    %c0_i32_1 = arith.constant 0 : i32
    return %c0_i32, %c0_i32_0 : i32, i32
  }
  func.func @transform_9(%arg0: i32) -> (i32, i32) {
    %c0_i32 = arith.constant 0 : i32
    %c0_i32_0 = arith.constant 0 : i32
    %c0_i32_1 = arith.constant 0 : i32
    return %c0_i32, %c0_i32_0 : i32, i32
  }
  func.func @transform_10(%arg0: i32) -> (i32, i32) {
    %c0_i32 = arith.constant 0 : i32
    %c0_i32_0 = arith.constant 0 : i32
    %c0_i32_1 = arith.constant 0 : i32
    return %c0_i32, %c0_i32_0 : i32, i32
  }
  func.func @transform_11(%arg0: i32) -> (i32, i32) {
    %c0_i32 = arith.constant 0 : i32
    %c0_i32_0 = arith.constant 0 : i32
    %c0_i32_1 = arith.constant 0 : i32
    return %c0_i32, %c0_i32_0 : i32, i32
  }
  func.func @transform_12(%arg0: i32) -> (i32, i32) {
    %c0_i32 = arith.constant 0 : i32
    %c0_i32_0 = arith.constant 0 : i32
    %c0_i32_1 = arith.constant 0 : i32
    return %c0_i32, %c0_i32_0 : i32, i32
  }
  func.func @transform_13(%arg0: i32) -> (i32, i32, i32) {
    %c0_i32 = arith.constant 0 : i32
    %c0_i32_0 = arith.constant 0 : i32
    %c0_i32_1 = arith.constant 0 : i32
    return %arg0, %c0_i32, %c0_i32_0 : i32, i32, i32
  }
}

module attributes {stable_mosaic.version = 11 : i64} {
  func.func @mixer_block_kernel(%arg0: i32, %arg1: memref<1x8x32xf32, #tpu.memory_space<vmem>>, %arg2: memref<1x32xf32, #tpu.memory_space<vmem>>, %arg3: memref<1x32xf32, #tpu.memory_space<vmem>>, %arg4: memref<16x8xbf16, #tpu.memory_space<vmem>>, %arg5: memref<16x1xf32, #tpu.memory_space<vmem>>, %arg6: memref<8x16xbf16, #tpu.memory_space<vmem>>, %arg7: memref<8x1xf32, #tpu.memory_space<vmem>>, %arg8: memref<1x32xf32, #tpu.memory_space<vmem>>, %arg9: memref<1x32xf32, #tpu.memory_space<vmem>>, %arg10: memref<32x64xbf16, #tpu.memory_space<vmem>>, %arg11: memref<1x64xf32, #tpu.memory_space<vmem>>, %arg12: memref<64x32xbf16, #tpu.memory_space<vmem>>, %arg13: memref<1x32xf32, #tpu.memory_space<vmem>>, %arg14: memref<1x8x32xf32, #tpu.memory_space<vmem>>) attributes {dimension_semantics = [#tpu.dimension_semantics<parallel>], iteration_bounds = array<i64: 2>, scalar_prefetch = 0 : i64, scratch_operands = 0 : i64, tpu.core_type = #tpu.core_type<tc>, window_params = [{transform_indices = @transform_0, window_bounds = array<i64: 1, 8, 32>}, {pipeline_mode = #tpu.pipeline_mode<synchronous>, transform_indices = @transform_1, window_bounds = array<i64: 1, 32>}, {pipeline_mode = #tpu.pipeline_mode<synchronous>, transform_indices = @transform_2, window_bounds = array<i64: 1, 32>}, {pipeline_mode = #tpu.pipeline_mode<synchronous>, transform_indices = @transform_3, window_bounds = array<i64: 16, 8>}, {pipeline_mode = #tpu.pipeline_mode<synchronous>, transform_indices = @transform_4, window_bounds = array<i64: 16, 1>}, {pipeline_mode = #tpu.pipeline_mode<synchronous>, transform_indices = @transform_5, window_bounds = array<i64: 8, 16>}, {pipeline_mode = #tpu.pipeline_mode<synchronous>, transform_indices = @transform_6, window_bounds = array<i64: 8, 1>}, {pipeline_mode = #tpu.pipeline_mode<synchronous>, transform_indices = @transform_7, window_bounds = array<i64: 1, 32>}, {pipeline_mode = #tpu.pipeline_mode<synchronous>, transform_indices = @transform_8, window_bounds = array<i64: 1, 32>}, {pipeline_mode = #tpu.pipeline_mode<synchronous>, transform_indices = @transform_9, window_bounds = array<i64: 32, 64>}, {pipeline_mode = #tpu.pipeline_mode<synchronous>, transform_indices = @transform_10, window_bounds = array<i64: 1, 64>}, {pipeline_mode = #tpu.pipeline_mode<synchronous>, transform_indices = @transform_11, window_bounds = array<i64: 64, 32>}, {pipeline_mode = #tpu.pipeline_mode<synchronous>, transform_indices = @transform_12, window_bounds = array<i64: 1, 32>}, {transform_indices = @transform_13, window_bounds = array<i64: 1, 8, 32>}]} {
    %c0 = arith.constant 0 : index
    %c0_0 = arith.constant 0 : index
    %0 = vector.load %arg2[%c0, %c0_0] : memref<1x32xf32, #tpu.memory_space<vmem>>, vector<1x32xf32>
    %c0_1 = arith.constant 0 : index
    %c0_2 = arith.constant 0 : index
    %1 = vector.load %arg3[%c0_1, %c0_2] : memref<1x32xf32, #tpu.memory_space<vmem>>, vector<1x32xf32>
    %c0_3 = arith.constant 0 : index
    %c0_4 = arith.constant 0 : index
    %2 = vector.load %arg8[%c0_3, %c0_4] : memref<1x32xf32, #tpu.memory_space<vmem>>, vector<1x32xf32>
    %c0_5 = arith.constant 0 : index
    %c0_6 = arith.constant 0 : index
    %3 = vector.load %arg9[%c0_5, %c0_6] : memref<1x32xf32, #tpu.memory_space<vmem>>, vector<1x32xf32>
    %c0_7 = arith.constant 0 : index
    %c0_8 = arith.constant 0 : index
    %4 = vector.load %arg4[%c0_7, %c0_8] : memref<16x8xbf16, #tpu.memory_space<vmem>>, vector<16x8xbf16>
    %c0_9 = arith.constant 0 : index
    %c0_10 = arith.constant 0 : index
    %5 = vector.load %arg5[%c0_9, %c0_10] : memref<16x1xf32, #tpu.memory_space<vmem>>, vector<16x1xf32>
    %c0_11 = arith.constant 0 : index
    %c0_12 = arith.constant 0 : index
    %6 = vector.load %arg6[%c0_11, %c0_12] : memref<8x16xbf16, #tpu.memory_space<vmem>>, vector<8x16xbf16>
    %c0_13 = arith.constant 0 : index
    %c0_14 = arith.constant 0 : index
    %7 = vector.load %arg7[%c0_13, %c0_14] : memref<8x1xf32, #tpu.memory_space<vmem>>, vector<8x1xf32>
    %c0_15 = arith.constant 0 : index
    %c0_16 = arith.constant 0 : index
    %8 = vector.load %arg10[%c0_15, %c0_16] : memref<32x64xbf16, #tpu.memory_space<vmem>>, vector<32x64xbf16>
    %c0_17 = arith.constant 0 : index
    %c0_18 = arith.constant 0 : index
    %9 = vector.load %arg11[%c0_17, %c0_18] : memref<1x64xf32, #tpu.memory_space<vmem>>, vector<1x64xf32>
    %c0_19 = arith.constant 0 : index
    %c0_20 = arith.constant 0 : index
    %10 = vector.load %arg12[%c0_19, %c0_20] : memref<64x32xbf16, #tpu.memory_space<vmem>>, vector<64x32xbf16>
    %c0_21 = arith.constant 0 : index
    %c0_22 = arith.constant 0 : index
    %11 = vector.load %arg13[%c0_21, %c0_22] : memref<1x32xf32, #tpu.memory_space<vmem>>, vector<1x32xf32>
    %c0_23 = arith.constant 0 : index
    %c0_24 = arith.constant 0 : index
    %c0_25 = arith.constant 0 : index
    %12 = vector.load %arg1[%c0_23, %c0_24, %c0_25] : memref<1x8x32xf32, #tpu.memory_space<vmem>>, vector<1x8x32xf32>
    %13 = vector.shape_cast %12 : vector<1x8x32xf32> to vector<8x32xf32>
    %cst = arith.constant dense<0.000000e+00> : vector<8xf32>
    %14 = vector.multi_reduction <add>, %13, %cst [1] : vector<8x32xf32> to vector<8xf32>
    %15 = vector.shape_cast %14 : vector<8xf32> to vector<8x1xf32>
    %cst_26 = arith.constant 3.200000e+01 : f32
    %16 = vector.broadcast %cst_26 : f32 to vector<8x1xf32>
    %17 = arith.divf %15, %16 : vector<8x1xf32>
    %18 = vector.broadcast %17 : vector<8x1xf32> to vector<8x32xf32>
    %19 = arith.subf %13, %18 : vector<8x32xf32>
    %20 = arith.mulf %19, %19 : vector<8x32xf32>
    %cst_27 = arith.constant dense<0.000000e+00> : vector<8xf32>
    %21 = vector.multi_reduction <add>, %20, %cst_27 [1] : vector<8x32xf32> to vector<8xf32>
    %22 = vector.shape_cast %21 : vector<8xf32> to vector<8x1xf32>
    %cst_28 = arith.constant 3.200000e+01 : f32
    %23 = vector.broadcast %cst_28 : f32 to vector<8x1xf32>
    %24 = arith.divf %22, %23 : vector<8x1xf32>
    %25 = vector.broadcast %17 : vector<8x1xf32> to vector<8x32xf32>
    %26 = arith.subf %13, %25 : vector<8x32xf32>
    %cst_29 = arith.constant 9.99999974E-6 : f32
    %27 = vector.broadcast %cst_29 : f32 to vector<8x1xf32>
    %28 = arith.addf %24, %27 : vector<8x1xf32>
    %29 = math.rsqrt %28 : vector<8x1xf32>
    %30 = vector.broadcast %29 : vector<8x1xf32> to vector<8x32xf32>
    %31 = arith.mulf %26, %30 : vector<8x32xf32>
    %32 = vector.broadcast %0 : vector<1x32xf32> to vector<8x32xf32>
    %33 = arith.mulf %31, %32 : vector<8x32xf32>
    %34 = vector.broadcast %1 : vector<1x32xf32> to vector<8x32xf32>
    %35 = arith.addf %33, %34 : vector<8x32xf32>
    %36 = arith.truncf %35 : vector<8x32xf32> to vector<8x32xbf16>
    %cst_30 = arith.constant dense<0.000000e+00> : vector<16x32xf32>
    %37 = tpu.matmul %4, %36, %cst_30 {dimension_numbers = #tpu.dot_dimension_numbers<[1], [0], [0], [1], [0, 0, 1, 1], [], []>} : vector<16x8xbf16>, vector<8x32xbf16>, vector<16x32xf32> -> vector<16x32xf32>
    %38 = vector.broadcast %5 : vector<16x1xf32> to vector<16x32xf32>
    %39 = arith.addf %37, %38 : vector<16x32xf32>
    %cst_31 = arith.constant 5.000000e-01 : f32
    %40 = vector.broadcast %cst_31 : f32 to vector<16x32xf32>
    %41 = arith.mulf %40, %39 : vector<16x32xf32>
    %cst_32 = arith.constant 0.707106769 : f32
    %42 = vector.broadcast %cst_32 : f32 to vector<16x32xf32>
    %43 = arith.mulf %39, %42 : vector<16x32xf32>
    %44 = math.erf %43 : vector<16x32xf32>
    %cst_33 = arith.constant 1.000000e+00 : f32
    %45 = vector.broadcast %cst_33 : f32 to vector<16x32xf32>
    %46 = arith.addf %45, %44 : vector<16x32xf32>
    %47 = arith.mulf %41, %46 : vector<16x32xf32>
    %48 = arith.truncf %47 : vector<16x32xf32> to vector<16x32xbf16>
    %cst_34 = arith.constant dense<0.000000e+00> : vector<8x32xf32>
    %49 = tpu.matmul %6, %48, %cst_34 {dimension_numbers = #tpu.dot_dimension_numbers<[1], [0], [0], [1], [0, 0, 1, 1], [], []>} : vector<8x16xbf16>, vector<16x32xbf16>, vector<8x32xf32> -> vector<8x32xf32>
    %50 = vector.broadcast %7 : vector<8x1xf32> to vector<8x32xf32>
    %51 = arith.addf %49, %50 : vector<8x32xf32>
    %52 = arith.addf %51, %13 : vector<8x32xf32>
    %cst_35 = arith.constant dense<0.000000e+00> : vector<8xf32>
    %53 = vector.multi_reduction <add>, %52, %cst_35 [1] : vector<8x32xf32> to vector<8xf32>
    %54 = vector.shape_cast %53 : vector<8xf32> to vector<8x1xf32>
    %cst_36 = arith.constant 3.200000e+01 : f32
    %55 = vector.broadcast %cst_36 : f32 to vector<8x1xf32>
    %56 = arith.divf %54, %55 : vector<8x1xf32>
    %57 = vector.broadcast %56 : vector<8x1xf32> to vector<8x32xf32>
    %58 = arith.subf %52, %57 : vector<8x32xf32>
    %59 = arith.mulf %58, %58 : vector<8x32xf32>
    %cst_37 = arith.constant dense<0.000000e+00> : vector<8xf32>
    %60 = vector.multi_reduction <add>, %59, %cst_37 [1] : vector<8x32xf32> to vector<8xf32>
    %61 = vector.shape_cast %60 : vector<8xf32> to vector<8x1xf32>
    %cst_38 = arith.constant 3.200000e+01 : f32
    %62 = vector.broadcast %cst_38 : f32 to vector<8x1xf32>
    %63 = arith.divf %61, %62 : vector<8x1xf32>
    %64 = vector.broadcast %56 : vector<8x1xf32> to vector<8x32xf32>
    %65 = arith.subf %52, %64 : vector<8x32xf32>
    %cst_39 = arith.constant 9.99999974E-6 : f32
    %66 = vector.broadcast %cst_39 : f32 to vector<8x1xf32>
    %67 = arith.addf %63, %66 : vector<8x1xf32>
    %68 = math.rsqrt %67 : vector<8x1xf32>
    %69 = vector.broadcast %68 : vector<8x1xf32> to vector<8x32xf32>
    %70 = arith.mulf %65, %69 : vector<8x32xf32>
    %71 = vector.broadcast %2 : vector<1x32xf32> to vector<8x32xf32>
    %72 = arith.mulf %70, %71 : vector<8x32xf32>
    %73 = vector.broadcast %3 : vector<1x32xf32> to vector<8x32xf32>
    %74 = arith.addf %72, %73 : vector<8x32xf32>
    %75 = arith.truncf %74 : vector<8x32xf32> to vector<8x32xbf16>
    %cst_40 = arith.constant dense<0.000000e+00> : vector<8x64xf32>
    %76 = tpu.matmul %75, %8, %cst_40 {dimension_numbers = #tpu.dot_dimension_numbers<[1], [0], [0], [1], [0, 0, 1, 1], [], []>} : vector<8x32xbf16>, vector<32x64xbf16>, vector<8x64xf32> -> vector<8x64xf32>
    %77 = vector.broadcast %9 : vector<1x64xf32> to vector<8x64xf32>
    %78 = arith.addf %76, %77 : vector<8x64xf32>
    %cst_41 = arith.constant 5.000000e-01 : f32
    %79 = vector.broadcast %cst_41 : f32 to vector<8x64xf32>
    %80 = arith.mulf %79, %78 : vector<8x64xf32>
    %cst_42 = arith.constant 0.707106769 : f32
    %81 = vector.broadcast %cst_42 : f32 to vector<8x64xf32>
    %82 = arith.mulf %78, %81 : vector<8x64xf32>
    %83 = math.erf %82 : vector<8x64xf32>
    %cst_43 = arith.constant 1.000000e+00 : f32
    %84 = vector.broadcast %cst_43 : f32 to vector<8x64xf32>
    %85 = arith.addf %84, %83 : vector<8x64xf32>
    %86 = arith.mulf %80, %85 : vector<8x64xf32>
    %87 = arith.truncf %86 : vector<8x64xf32> to vector<8x64xbf16>
    %cst_44 = arith.constant dense<0.000000e+00> : vector<8x32xf32>
    %88 = tpu.matmul %87, %10, %cst_44 {dimension_numbers = #tpu.dot_dimension_numbers<[1], [0], [0], [1], [0, 0, 1, 1], [], []>} : vector<8x64xbf16>, vector<64x32xbf16>, vector<8x32xf32> -> vector<8x32xf32>
    %89 = vector.broadcast %11 : vector<1x32xf32> to vector<8x32xf32>
    %90 = arith.addf %88, %89 : vector<8x32xf32>
    %91 = arith.addf %90, %52 : vector<8x32xf32>
    %c0_45 = arith.constant 0 : index
    %c0_46 = arith.constant 0 : index
    %c0_47 = arith.constant 0 : index
    %92 = vector.load %arg14[%c0_45, %c0_46, %c0_47] : memref<1x8x32xf32, #tpu.memory_space<vmem>>, vector<1x8x32xf32>
    %93 = vector.shape_cast %92 : vector<1x8x32xf32> to vector<8x32xf32>
    %94 = vector.shape_cast %91 : vector<8x32xf32> to vector<1x8x32xf32>
    tpu.vector_store %arg14[%c0_45, %c0_46, %c0_47], %94 {strides = array<i32>} : memref<1x8x32xf32, #tpu.memory_space<vmem>>, vector<1x8x32xf32>,
    return
  }
  func.func @transform_0(%arg0: i32) -> (i32, i32, i32) {
    %c0_i32 = arith.constant 0 : i32
    %c0_i32_0 = arith.constant 0 : i32
    %c0_i32_1 = arith.constant 0 : i32
    return %arg0, %c0_i32, %c0_i32_0 : i32, i32, i32
  }
  func.func @transform_1(%arg0: i32) -> (i32, i32) {
    %c0_i32 = arith.constant 0 : i32
    %c0_i32_0 = arith.constant 0 : i32
    %c0_i32_1 = arith.constant 0 : i32
    return %c0_i32, %c0_i32_0 : i32, i32
  }
  func.func @transform_2(%arg0: i32) -> (i32, i32) {
    %c0_i32 = arith.constant 0 : i32
    %c0_i32_0 = arith.constant 0 : i32
    %c0_i32_1 = arith.constant 0 : i32
    return %c0_i32, %c0_i32_0 : i32, i32
  }
  func.func @transform_3(%arg0: i32) -> (i32, i32) {
    %c0_i32 = arith.constant 0 : i32
    %c0_i32_0 = arith.constant 0 : i32
    %c0_i32_1 = arith.constant 0 : i32
    return %c0_i32, %c0_i32_0 : i32, i32
  }
  func.func @transform_4(%arg0: i32) -> (i32, i32) {
    %c0_i32 = arith.constant 0 : i32
    %c0_i32_0 = arith.constant 0 : i32
    %c0_i32_1 = arith.constant 0 : i32
    return %c0_i32, %c0_i32_0 : i32, i32
  }
  func.func @transform_5(%arg0: i32) -> (i32, i32) {
    %c0_i32 = arith.constant 0 : i32
    %c0_i32_0 = arith.constant 0 : i32
    %c0_i32_1 = arith.constant 0 : i32
    return %c0_i32, %c0_i32_0 : i32, i32
  }
  func.func @transform_6(%arg0: i32) -> (i32, i32) {
    %c0_i32 = arith.constant 0 : i32
    %c0_i32_0 = arith.constant 0 : i32
    %c0_i32_1 = arith.constant 0 : i32
    return %c0_i32, %c0_i32_0 : i32, i32
  }
  func.func @transform_7(%arg0: i32) -> (i32, i32) {
    %c0_i32 = arith.constant 0 : i32
    %c0_i32_0 = arith.constant 0 : i32
    %c0_i32_1 = arith.constant 0 : i32
    return %c0_i32, %c0_i32_0 : i32, i32
  }
  func.func @transform_8(%arg0: i32) -> (i32, i32) {
    %c0_i32 = arith.constant 0 : i32
    %c0_i32_0 = arith.constant 0 : i32
    %c0_i32_1 = arith.constant 0 : i32
    return %c0_i32, %c0_i32_0 : i32, i32
  }
  func.func @transform_9(%arg0: i32) -> (i32, i32) {
    %c0_i32 = arith.constant 0 : i32
    %c0_i32_0 = arith.constant 0 : i32
    %c0_i32_1 = arith.constant 0 : i32
    return %c0_i32, %c0_i32_0 : i32, i32
  }
  func.func @transform_10(%arg0: i32) -> (i32, i32) {
    %c0_i32 = arith.constant 0 : i32
    %c0_i32_0 = arith.constant 0 : i32
    %c0_i32_1 = arith.constant 0 : i32
    return %c0_i32, %c0_i32_0 : i32, i32
  }
  func.func @transform_11(%arg0: i32) -> (i32, i32) {
    %c0_i32 = arith.constant 0 : i32
    %c0_i32_0 = arith.constant 0 : i32
    %c0_i32_1 = arith.constant 0 : i32
    return %c0_i32, %c0_i32_0 : i32, i32
  }
  func.func @transform_12(%arg0: i32) -> (i32, i32) {
    %c0_i32 = arith.constant 0 : i32
    %c0_i32_0 = arith.constant 0 : i32
    %c0_i32_1 = arith.constant 0 : i32
    return %c0_i32, %c0_i32_0 : i32, i32
  }
  func.func @transform_13(%arg0: i32) -> (i32, i32, i32) {
    %c0_i32 = arith.constant 0 : i32
    %c0_i32_0 = arith.constant 0 : i32
    %c0_i32_1 = arith.constant 0 : i32
    return %arg0, %c0_i32, %c0_i32_0 : i32, i32, i32
  }
}

</mosaic_0001>

<llo_original>
// kernel: tpu_custom_call.1
$region0: #{tpu_custom_call.1}
  #allocation0 [shape = 'u32[]', space=smem, size = 0x4, offset = 0x4, fixed_abs, tag = 'smem constant byte address 0x4 - core index']
  #allocation1 [shape = 'u32[144,128]{1,0:T(1,128)}', space=vmem, size = 0x12000, scoped, tag = 'internal scratch']
  %s0 = inlined_call_operand.vmem [shape: f32[2,8,32], index: 0, kind: input, shape index: {}]
  %s1 = inlined_call_operand.vmem [shape: f32[1,32], index: 1, kind: input, shape index: {}]
  %s2 = inlined_call_operand.vmem [shape: f32[1,32], index: 2, kind: input, shape index: {}]
  %s3 = inlined_call_operand.vmem [shape: bf16[16,8], index: 3, kind: input, shape index: {}]
  %s4 = inlined_call_operand.vmem [shape: f32[16,1], index: 4, kind: input, shape index: {}]
  %s5 = inlined_call_operand.vmem [shape: bf16[8,16], index: 5, kind: input, shape index: {}]
  %s6 = inlined_call_operand.vmem [shape: f32[8,1], index: 6, kind: input, shape index: {}]
  %s7 = inlined_call_operand.vmem [shape: f32[1,32], index: 7, kind: input, shape index: {}]
  %s8 = inlined_call_operand.vmem [shape: f32[1,32], index: 8, kind: input, shape index: {}]
  %s9 = inlined_call_operand.vmem [shape: bf16[32,64], index: 9, kind: input, shape index: {}]
  %s10 = inlined_call_operand.vmem [shape: f32[1,64], index: 10, kind: input, shape index: {}]
  %s11 = inlined_call_operand.vmem [shape: bf16[64,32], index: 11, kind: input, shape index: {}]
  %s12 = inlined_call_operand.vmem [shape: f32[1,32], index: 12, kind: input, shape index: {}]
  %s13 = inlined_call_operand.hbm [shape: f32[2,8,32], index: 13, kind: output, shape index: {}]
  %s14 = sld [smem:[#allocation0]]
  $region85: #{tpu_custom_call.1} parent=0
    _
  %s16 = ssub.s32 1, %s14
  %s17 = scalar_select 0, %s16, %s14
  $region1: #{tpu_custom_call.1} parent=0
    #allocation2 [shape = 'u8[8192]{0}', space=vmem, size = 0x2000, scoped, tag = 'output window, operand 0']
    #allocation3 [shape = 's32[2]{0}', space=sflag, size = 0x8, scoped, tag = 'scoped memory for tpu_custom_call.1']
    %18 = vsyncpa [#allocation3], 0
    %s19 = scalar_lea.sflag [#allocation3], 1
    %20 = vsyncpa %s19, 0
    loop: start=0, step=1, limit=4
    $region2: #{tpu_custom_call.1} parent=1 // loop_pre_header
      _
    $region3: #{tpu_custom_call.1} parent=1 // loop_header
      %s22 = sphi 0, %s26
      %p23 = scmp.ge.s32.totalorder %s22, 4
      %s32 = sphi 0, %s34
      %s35 = sphi 0, %s32
      %s36 = sphi 0, %s35
      %s52 = sphi 0, %s36
      %s56 = sphi 0, %s56
      %s58 = sphi 0, %s56
      %s59 = sphi 0, %s58
      %s73 = sphi 0, %s59
      %s77 = sphi 0, %s77
      %s79 = sphi 0, %s77
      %s80 = sphi 0, %s79
      %s94 = sphi 0, %s80
      %s98 = sphi 0, %s98
      %s100 = sphi 0, %s98
      %s101 = sphi 0, %s100
      %s115 = sphi 0, %s101
      %s119 = sphi 0, %s119
      %s121 = sphi 0, %s119
      %s122 = sphi 0, %s121
      %s136 = sphi 0, %s122
      %s140 = sphi 0, %s140
      %s142 = sphi 0, %s140
      %s143 = sphi 0, %s142
      %s157 = sphi 0, %s143
      %s161 = sphi 0, %s161
      %s163 = sphi 0, %s161
      %s164 = sphi 0, %s163
      %s178 = sphi 0, %s164
      %s182 = sphi 0, %s182
      %s184 = sphi 0, %s182
      %s185 = sphi 0, %s184
      %s199 = sphi 0, %s185
      %s203 = sphi 0, %s203
      %s205 = sphi 0, %s203
      %s206 = sphi 0, %s205
      %s220 = sphi 0, %s206
      %s224 = sphi 0, %s224
      %s226 = sphi 0, %s224
      %s227 = sphi 0, %s226
      %s241 = sphi 0, %s227
      %s245 = sphi 0, %s245
      %s247 = sphi 0, %s245
      %s248 = sphi 0, %s247
      %s262 = sphi 0, %s248
      %s266 = sphi 0, %s266
      %s268 = sphi 0, %s266
      %s269 = sphi 0, %s268
      %s283 = sphi 0, %s269
      %s287 = sphi 0, %s287
      %s289 = sphi 0, %s287
      %s290 = sphi 0, %s289
      %s304 = sphi 0, %s290
      %s310 = sphi 0, %s312
      %s313 = sphi 0, %s310
      %s314 = sphi 0, %s313
      %s330 = sphi 0, %s314
    $region4: #{tpu_custom_call.1} parent=1 // loop_header_branch
      %25 = sbr.rel (%p23) target = $region8
    $region5: #{tpu_custom_call.1} parent=1 // loop_body
      %s27 = ssub.s32 %s22, 1
      %s28 = ssub.s32 %s22, 2
      %s29 = sadd.s32 %s22, 1
      %s30 = ssub.s32 %s22, %s29
      %p31 = scmp.eq.s32.totalorder %s30, 0
      %s33 = sadd.s32 %s32, 1
      %s34 = scalar_select %p31, %s32, %s33
      %p37 = pneg %p31
      %p38 = scmp.eq.s32.totalorder %s22, 1
      %p39 = por %p37, %p38
      %p40 = scmp.ne.s32.totalorder %s32, %s35
      %p41 = scmp.eq.s32.totalorder %s22, 0
      %p42 = por %p40, %p41
      %p43 = scmp.ne.s32.totalorder %s32, %s35
      %p44 = scmp.eq.s32.totalorder %s27, 1
      %p45 = por %p43, %p44
      %p46 = scmp.ne.s32.totalorder %s35, %s36
      %p47 = scmp.eq.s32.totalorder %s27, 0
      %p48 = por %p46, %p47
      %p49 = scmp.ne.s32.totalorder %s35, %s36
      %p50 = scmp.eq.s32.totalorder %s28, 1
      %p51 = por %p49, %p50
      %p53 = scmp.ne.s32.totalorder %s36, %s52
      %p54 = scmp.eq.s32.totalorder %s28, 0
      %p55 = por %p53, %p54
      %s57 = sadd.s32 %s56, 1
      %p60 = scmp.eq.s32.totalorder %s22, 1
      %p61 = scmp.ne.s32.totalorder %s56, %s58
      %p62 = scmp.eq.s32.totalorder %s22, 0
      %p63 = por %p61, %p62
      %p64 = scmp.ne.s32.totalorder %s56, %s58
      %p65 = scmp.eq.s32.totalorder %s27, 1
      %p66 = por %p64, %p65
      %p67 = scmp.ne.s32.totalorder %s58, %s59
      %p68 = scmp.eq.s32.totalorder %s27, 0
      %p69 = por %p67, %p68
      %p70 = scmp.ne.s32.totalorder %s58, %s59
      %p71 = scmp.eq.s32.totalorder %s28, 1
      %p72 = por %p70, %p71
      %p74 = scmp.ne.s32.totalorder %s59, %s73
      %p75 = scmp.eq.s32.totalorder %s28, 0
      %p76 = por %p74, %p75
      %s78 = sadd.s32 %s77, 1
      %p81 = scmp.eq.s32.totalorder %s22, 1
      %p82 = scmp.ne.s32.totalorder %s77, %s79
      %p83 = scmp.eq.s32.totalorder %s22, 0
      %p84 = por %p82, %p83
      %p85 = scmp.ne.s32.totalorder %s77, %s79
      %p86 = scmp.eq.s32.totalorder %s27, 1
      %p87 = por %p85, %p86
      %p88 = scmp.ne.s32.totalorder %s79, %s80
      %p89 = scmp.eq.s32.totalorder %s27, 0
      %p90 = por %p88, %p89
      %p91 = scmp.ne.s32.totalorder %s79, %s80
      %p92 = scmp.eq.s32.totalorder %s28, 1
      %p93 = por %p91, %p92
      %p95 = scmp.ne.s32.totalorder %s80, %s94
      %p96 = scmp.eq.s32.totalorder %s28, 0
      %p97 = por %p95, %p96
      %s99 = sadd.s32 %s98, 1
      %p102 = scmp.eq.s32.totalorder %s22, 1
      %p103 = scmp.ne.s32.totalorder %s98, %s100
      %p104 = scmp.eq.s32.totalorder %s22, 0
      %p105 = por %p103, %p104
      %p106 = scmp.ne.s32.totalorder %s98, %s100
      %p107 = scmp.eq.s32.totalorder %s27, 1
      %p108 = por %p106, %p107
      %p109 = scmp.ne.s32.totalorder %s100, %s101
      %p110 = scmp.eq.s32.totalorder %s27, 0
      %p111 = por %p109, %p110
      %p112 = scmp.ne.s32.totalorder %s100, %s101
      %p113 = scmp.eq.s32.totalorder %s28, 1
      %p114 = por %p112, %p113
      %p116 = scmp.ne.s32.totalorder %s101, %s115
      %p117 = scmp.eq.s32.totalorder %s28, 0
      %p118 = por %p116, %p117
      %s120 = sadd.s32 %s119, 1
      %p123 = scmp.eq.s32.totalorder %s22, 1
      %p124 = scmp.ne.s32.totalorder %s119, %s121
      %p125 = scmp.eq.s32.totalorder %s22, 0
      %p126 = por %p124, %p125
      %p127 = scmp.ne.s32.totalorder %s119, %s121
      %p128 = scmp.eq.s32.totalorder %s27, 1
      %p129 = por %p127, %p128
      %p130 = scmp.ne.s32.totalorder %s121, %s122
      %p131 = scmp.eq.s32.totalorder %s27, 0
      %p132 = por %p130, %p131
      %p133 = scmp.ne.s32.totalorder %s121, %s122
      %p134 = scmp.eq.s32.totalorder %s28, 1
      %p135 = por %p133, %p134
      %p137 = scmp.ne.s32.totalorder %s122, %s136
      %p138 = scmp.eq.s32.totalorder %s28, 0
      %p139 = por %p137, %p138
      %s141 = sadd.s32 %s140, 1
      %p144 = scmp.eq.s32.totalorder %s22, 1
      %p145 = scmp.ne.s32.totalorder %s140, %s142
      %p146 = scmp.eq.s32.totalorder %s22, 0
      %p147 = por %p145, %p146
      %p148 = scmp.ne.s32.totalorder %s140, %s142
      %p149 = scmp.eq.s32.totalorder %s27, 1
      %p150 = por %p148, %p149
      %p151 = scmp.ne.s32.totalorder %s142, %s143
      %p152 = scmp.eq.s32.totalorder %s27, 0
      %p153 = por %p151, %p152
      %p154 = scmp.ne.s32.totalorder %s142, %s143
      %p155 = scmp.eq.s32.totalorder %s28, 1
      %p156 = por %p154, %p155
      %p158 = scmp.ne.s32.totalorder %s143, %s157
      %p159 = scmp.eq.s32.totalorder %s28, 0
      %p160 = por %p158, %p159
      %s162 = sadd.s32 %s161, 1
      %p165 = scmp.eq.s32.totalorder %s22, 1
      %p166 = scmp.ne.s32.totalorder %s161, %s163
      %p167 = scmp.eq.s32.totalorder %s22, 0
      %p168 = por %p166, %p167
      %p169 = scmp.ne.s32.totalorder %s161, %s163
      %p170 = scmp.eq.s32.totalorder %s27, 1
      %p171 = por %p169, %p170
      %p172 = scmp.ne.s32.totalorder %s163, %s164
      %p173 = scmp.eq.s32.totalorder %s27, 0
      %p174 = por %p172, %p173
      %p175 = scmp.ne.s32.totalorder %s163, %s164
      %p176 = scmp.eq.s32.totalorder %s28, 1
      %p177 = por %p175, %p176
      %p179 = scmp.ne.s32.totalorder %s164, %s178
      %p180 = scmp.eq.s32.totalorder %s28, 0
      %p181 = por %p179, %p180
      %s183 = sadd.s32 %s182, 1
      %p186 = scmp.eq.s32.totalorder %s22, 1
      %p187 = scmp.ne.s32.totalorder %s182, %s184
      %p188 = scmp.eq.s32.totalorder %s22, 0
      %p189 = por %p187, %p188
      %p190 = scmp.ne.s32.totalorder %s182, %s184
      %p191 = scmp.eq.s32.totalorder %s27, 1
      %p192 = por %p190, %p191
      %p193 = scmp.ne.s32.totalorder %s184, %s185
      %p194 = scmp.eq.s32.totalorder %s27, 0
      %p195 = por %p193, %p194
      %p196 = scmp.ne.s32.totalorder %s184, %s185
      %p197 = scmp.eq.s32.totalorder %s28, 1
      %p198 = por %p196, %p197
      %p200 = scmp.ne.s32.totalorder %s185, %s199
      %p201 = scmp.eq.s32.totalorder %s28, 0
      %p202 = por %p200, %p201
      %s204 = sadd.s32 %s203, 1
      %p207 = scmp.eq.s32.totalorder %s22, 1
      %p208 = scmp.ne.s32.totalorder %s203, %s205
      %p209 = scmp.eq.s32.totalorder %s22, 0
      %p210 = por %p208, %p209
      %p211 = scmp.ne.s32.totalorder %s203, %s205
      %p212 = scmp.eq.s32.totalorder %s27, 1
      %p213 = por %p211, %p212
      %p214 = scmp.ne.s32.totalorder %s205, %s206
      %p215 = scmp.eq.s32.totalorder %s27, 0
      %p216 = por %p214, %p215
      %p217 = scmp.ne.s32.totalorder %s205, %s206
      %p218 = scmp.eq.s32.totalorder %s28, 1
      %p219 = por %p217, %p218
      %p221 = scmp.ne.s32.totalorder %s206, %s220
      %p222 = scmp.eq.s32.totalorder %s28, 0
      %p223 = por %p221, %p222
      %s225 = sadd.s32 %s224, 1
      %p228 = scmp.eq.s32.totalorder %s22, 1
      %p229 = scmp.ne.s32.totalorder %s224, %s226
      %p230 = scmp.eq.s32.totalorder %s22, 0
      %p231 = por %p229, %p230
      %p232 = scmp.ne.s32.totalorder %s224, %s226
      %p233 = scmp.eq.s32.totalorder %s27, 1
      %p234 = por %p232, %p233
      %p235 = scmp.ne.s32.totalorder %s226, %s227
      %p236 = scmp.eq.s32.totalorder %s27, 0
      %p237 = por %p235, %p236
      %p238 = scmp.ne.s32.totalorder %s226, %s227
      %p239 = scmp.eq.s32.totalorder %s28, 1
      %p240 = por %p238, %p239
      %p242 = scmp.ne.s32.totalorder %s227, %s241
      %p243 = scmp.eq.s32.totalorder %s28, 0
      %p244 = por %p242, %p243
      %s246 = sadd.s32 %s245, 1
      %p249 = scmp.eq.s32.totalorder %s22, 1
      %p250 = scmp.ne.s32.totalorder %s245, %s247
      %p251 = scmp.eq.s32.totalorder %s22, 0
      %p252 = por %p250, %p251
      %p253 = scmp.ne.s32.totalorder %s245, %s247
      %p254 = scmp.eq.s32.totalorder %s27, 1
      %p255 = por %p253, %p254
      %p256 = scmp.ne.s32.totalorder %s247, %s248
      %p257 = scmp.eq.s32.totalorder %s27, 0
      %p258 = por %p256, %p257
      %p259 = scmp.ne.s32.totalorder %s247, %s248
      %p260 = scmp.eq.s32.totalorder %s28, 1
      %p261 = por %p259, %p260
      %p263 = scmp.ne.s32.totalorder %s248, %s262
      %p264 = scmp.eq.s32.totalorder %s28, 0
      %p265 = por %p263, %p264
      %s267 = sadd.s32 %s266, 1
      %p270 = scmp.eq.s32.totalorder %s22, 1
      %p271 = scmp.ne.s32.totalorder %s266, %s268
      %p272 = scmp.eq.s32.totalorder %s22, 0
      %p273 = por %p271, %p272
      %p274 = scmp.ne.s32.totalorder %s266, %s268
      %p275 = scmp.eq.s32.totalorder %s27, 1
      %p276 = por %p274, %p275
      %p277 = scmp.ne.s32.totalorder %s268, %s269
      %p278 = scmp.eq.s32.totalorder %s27, 0
      %p279 = por %p277, %p278
      %p280 = scmp.ne.s32.totalorder %s268, %s269
      %p281 = scmp.eq.s32.totalorder %s28, 1
      %p282 = por %p280, %p281
      %p284 = scmp.ne.s32.totalorder %s269, %s283
      %p285 = scmp.eq.s32.totalorder %s28, 0
      %p286 = por %p284, %p285
      %s288 = sadd.s32 %s287, 1
      %p291 = scmp.eq.s32.totalorder %s22, 1
      %p292 = scmp.ne.s32.totalorder %s287, %s289
      %p293 = scmp.eq.s32.totalorder %s22, 0
      %p294 = por %p292, %p293
      %p295 = scmp.ne.s32.totalorder %s287, %s289
      %p296 = scmp.eq.s32.totalorder %s27, 1
      %p297 = por %p295, %p296
      %p298 = scmp.ne.s32.totalorder %s289, %s290
      %p299 = scmp.eq.s32.totalorder %s27, 0
      %p300 = por %p298, %p299
      %p301 = scmp.ne.s32.totalorder %s289, %s290
      %p302 = scmp.eq.s32.totalorder %s28, 1
      %p303 = por %p301, %p302
      %p305 = scmp.ne.s32.totalorder %s290, %s304
      %p306 = scmp.eq.s32.totalorder %s28, 0
      %p307 = por %p305, %p306
      %s308 = ssub.s32 %s22, %s29
      %p309 = scmp.eq.s32.totalorder %s308, 0
      %s311 = sadd.s32 %s310, 1
      %s312 = scalar_select %p309, %s310, %s311
      %p315 = pneg %p309
      %p316 = scmp.eq.s32.totalorder %s22, 1
      %p317 = por %p315, %p316
      %p318 = scmp.ne.s32.totalorder %s310, %s313
      %p319 = scmp.eq.s32.totalorder %s22, 0
      %p320 = por %p318, %p319
      %p321 = scmp.ne.s32.totalorder %s310, %s313
      %p322 = scmp.eq.s32.totalorder %s27, 1
      %p323 = por %p321, %p322
      %p324 = scmp.ne.s32.totalorder %s313, %s314
      %p325 = scmp.eq.s32.totalorder %s27, 0
      %p326 = por %p324, %p325
      %p327 = scmp.ne.s32.totalorder %s313, %s314
      %p328 = scmp.eq.s32.totalorder %s28, 1
      %p329 = por %p327, %p328
      %p331 = scmp.ne.s32.totalorder %s314, %s330
      %p332 = scmp.eq.s32.totalorder %s28, 0
      %p333 = por %p331, %p332
      %p334 = scmp.le.s32.totalorder 1, %s22
      %p335 = scmp.lt.s32.totalorder %s22, 3
      %p336 = pnand %p334, %p335
      %p337 = pneg %p336
      // Predicated region
      $region9: #{tpu_custom_call.1} parent=5 // pred_check
        _
      $region10: #{tpu_custom_call.1} parent=5 // pred_check_branch
        %339 = sbr.rel (%p336) target = $region12
      $region11: #{tpu_custom_call.1} parent=5 // pred_region
        %s340 = ssub.s32 %s22, 1
        // Predicated region
        $region13: #{tpu_custom_call.1} parent=11 // pred_check
          %p341 = pneg %p69
        $region14: #{tpu_custom_call.1} parent=11 // pred_check_branch
          %343 = sbr.rel (%p341) target = $region16
        $region15: #{tpu_custom_call.1} parent=11 // pred_region
          _
        $region16: #{tpu_custom_call.1} parent=11 // pred_fallthru
          _
        // Predicated region
        $region17: #{tpu_custom_call.1} parent=11 // pred_check
          %p344 = pneg %p90
        $region18: #{tpu_custom_call.1} parent=11 // pred_check_branch
          %346 = sbr.rel (%p344) target = $region20
        $region19: #{tpu_custom_call.1} parent=11 // pred_region
          _
        $region20: #{tpu_custom_call.1} parent=11 // pred_fallthru
          _
        // Predicated region
        $region21: #{tpu_custom_call.1} parent=11 // pred_check
          %p347 = pneg %p111
        $region22: #{tpu_custom_call.1} parent=11 // pred_check_branch
          %349 = sbr.rel (%p347) target = $region24
        $region23: #{tpu_custom_call.1} parent=11 // pred_region
          _
        $region24: #{tpu_custom_call.1} parent=11 // pred_fallthru
          _
        // Predicated region
        $region25: #{tpu_custom_call.1} parent=11 // pred_check
          %p350 = pneg %p132
        $region26: #{tpu_custom_call.1} parent=11 // pred_check_branch
          %352 = sbr.rel (%p350) target = $region28
        $region27: #{tpu_custom_call.1} parent=11 // pred_region
          _
        $region28: #{tpu_custom_call.1} parent=11 // pred_fallthru
          _
        // Predicated region
        $region29: #{tpu_custom_call.1} parent=11 // pred_check
          %p353 = pneg %p153
        $region30: #{tpu_custom_call.1} parent=11 // pred_check_branch
          %355 = sbr.rel (%p353) target = $region32
        $region31: #{tpu_custom_call.1} parent=11 // pred_region
          _
        $region32: #{tpu_custom_call.1} parent=11 // pred_fallthru
          _
        // Predicated region
        $region33: #{tpu_custom_call.1} parent=11 // pred_check
          %p356 = pneg %p174
        $region34: #{tpu_custom_call.1} parent=11 // pred_check_branch
          %358 = sbr.rel (%p356) target = $region36
        $region35: #{tpu_custom_call.1} parent=11 // pred_region
          _
        $region36: #{tpu_custom_call.1} parent=11 // pred_fallthru
          _
        // Predicated region
        $region37: #{tpu_custom_call.1} parent=11 // pred_check
          %p359 = pneg %p195
        $region38: #{tpu_custom_call.1} parent=11 // pred_check_branch
          %361 = sbr.rel (%p359) target = $region40
        $region39: #{tpu_custom_call.1} parent=11 // pred_region
          _
        $region40: #{tpu_custom_call.1} parent=11 // pred_fallthru
          _
        // Predicated region
        $region41: #{tpu_custom_call.1} parent=11 // pred_check
          %p362 = pneg %p216
        $region42: #{tpu_custom_call.1} parent=11 // pred_check_branch
          %364 = sbr.rel (%p362) target = $region44
        $region43: #{tpu_custom_call.1} parent=11 // pred_region
          _
        $region44: #{tpu_custom_call.1} parent=11 // pred_fallthru
          _
        // Predicated region
        $region45: #{tpu_custom_call.1} parent=11 // pred_check
          %p365 = pneg %p237
        $region46: #{tpu_custom_call.1} parent=11 // pred_check_branch
          %367 = sbr.rel (%p365) target = $region48
        $region47: #{tpu_custom_call.1} parent=11 // pred_region
          _
        $region48: #{tpu_custom_call.1} parent=11 // pred_fallthru
          _
        // Predicated region
        $region49: #{tpu_custom_call.1} parent=11 // pred_check
          %p368 = pneg %p258
        $region50: #{tpu_custom_call.1} parent=11 // pred_check_branch
          %370 = sbr.rel (%p368) target = $region52
        $region51: #{tpu_custom_call.1} parent=11 // pred_region
          _
        $region52: #{tpu_custom_call.1} parent=11 // pred_fallthru
          _
        // Predicated region
        $region53: #{tpu_custom_call.1} parent=11 // pred_check
          %p371 = pneg %p279
        $region54: #{tpu_custom_call.1} parent=11 // pred_check_branch
          %373 = sbr.rel (%p371) target = $region56
        $region55: #{tpu_custom_call.1} parent=11 // pred_region
          _
        $region56: #{tpu_custom_call.1} parent=11 // pred_fallthru
          _
        // Predicated region
        $region57: #{tpu_custom_call.1} parent=11 // pred_check
          %p374 = pneg %p300
        $region58: #{tpu_custom_call.1} parent=11 // pred_check_branch
          %376 = sbr.rel (%p374) target = $region60
        $region59: #{tpu_custom_call.1} parent=11 // pred_region
          _
        $region60: #{tpu_custom_call.1} parent=11 // pred_fallthru
          _
      $region12: #{tpu_custom_call.1} parent=5 // pred_fallthru
        _
      %p377 = scmp.lt.s32.totalorder %s22, 2
      // Predicated region
      $region61: #{tpu_custom_call.1} parent=5 // pred_check
        %p378 = pneg %p377
      $region62: #{tpu_custom_call.1} parent=5 // pred_check_branch
        %380 = sbr.rel (%p378) target = $region64
      $region63: #{tpu_custom_call.1} parent=5 // pred_region
        // Predicated region
        $region65: #{tpu_custom_call.1} parent=63 // pred_check
          %p381 = pneg %p42
        $region66: #{tpu_custom_call.1} parent=63 // pred_check_branch
          %383 = sbr.rel (%p381) target = $region68
        $region67: #{tpu_custom_call.1} parent=63 // pred_region
          %p384 = scmp.lt.s32.totalorder %s22, 1
          %s385 = scalar_select %p384, %s22, 1
          %s386 = smul.addr %s385, 8
          %s387 = scalar_lea.vmem %s0, %s386
        $region68: #{tpu_custom_call.1} parent=63 // pred_fallthru
          _
      $region64: #{tpu_custom_call.1} parent=5 // pred_fallthru
        _
      %p388 = scmp.le.s32.totalorder 1, %s22
      %p389 = scmp.lt.s32.totalorder %s22, 3
      %p390 = pnand %p388, %p389
      %p391 = pneg %p390
      // Predicated region
      $region69: #{tpu_custom_call.1} parent=5 // pred_check
        _
      $region70: #{tpu_custom_call.1} parent=5 // pred_check_branch
        %393 = sbr.rel (%p390) target = $region72
      $region71: #{tpu_custom_call.1} parent=5 // pred_region
        %s394 = ssub.s32 %s22, 1
        %p395 = scmp.lt.s32.totalorder %s27, 1
        %s396 = scalar_select %p395, %s27, 1
        %s397 = smul.addr %s396, 8
        %s398 = scalar_lea.vmem %s0, %s397
        %p399 = pneg %p48
        %p400 = pneg %p45
        %p401 = pneg %p69
        %p402 = pneg %p66
        %p403 = pneg %p90
        %p404 = pneg %p87
        %p405 = pneg %p111
        %p406 = pneg %p108
        %p407 = pneg %p132
        %p408 = pneg %p129
        %p409 = pneg %p153
        %p410 = pneg %p150
        %p411 = pneg %p174
        %p412 = pneg %p171
        %p413 = pneg %p195
        %p414 = pneg %p192
        %p415 = pneg %p216
        %p416 = pneg %p213
        %p417 = pneg %p237
        %p418 = pneg %p234
        %p419 = pneg %p258
        %p420 = pneg %p255
        %p421 = pneg %p279
        %p422 = pneg %p276
        %p423 = pneg %p300
        %p424 = pneg %p297
        %p425 = pneg %p326
        %p426 = pneg %p323
        %s427 = sand.u32 %s313, 1
        %s428 = scalar_lea.sflag [#allocation3], %s427
        %s429 = sand.u32 %s313, 1
        %s430 = smul.addr %s429, 8
        %s431 = scalar_lea.vmem [#allocation2], %s430
        %p432 = scmp.lt.s32.totalorder %s27, 1
        %s433 = scalar_select %p432, %s27, 1
        %s434 = smul.addr %s433, 8
        %s435 = scalar_lea.vmem %s0, %s434
        %v437 = vld [vmem:[%s1] sm:$0x1]
        %v438 = vld [vmem:[%s2] sm:$0x1]
        %v439 = vld [vmem:[%s7] sm:$0x1]
        %v440 = vld [vmem:[%s8] sm:$0x1]
        %v441 = vld [vmem:[%s3] sm:$0xf]
        %v442 = vld [vmem:[%s3 + $0x4] sm:$0xf]
        %v443 = vld [vmem:[%s4] sm:$0xff]
        %v444 = vld [vmem:[%s4 + $0x8] sm:$0xff]
        %v445 = vld [vmem:[%s5] sm:$0xf]
        %v446 = vld [vmem:[%s6] sm:$0xff]
        %v447 = vld [vmem:[%s9] sm:$0xf]
        %v448 = vld [vmem:[%s9 + $0x4] sm:$0xf]
        %v449 = vld [vmem:[%s9 + $0x8] sm:$0xf]
        %v450 = vld [vmem:[%s9 + $0xc] sm:$0xf]
        %v451 = vld [vmem:[%s10] sm:$0x1]
        %v452 = vld [vmem:[%s11] sm:$0xf]
        %v453 = vld [vmem:[%s11 + $0x4] sm:$0xf]
        %v454 = vld [vmem:[%s11 + $0x8] sm:$0xf]
        %v455 = vld [vmem:[%s11 + $0xc] sm:$0xf]
        %v456 = vld [vmem:[%s11 + $0x10] sm:$0xf]
        %v457 = vld [vmem:[%s11 + $0x14] sm:$0xf]
        %v458 = vld [vmem:[%s11 + $0x18] sm:$0xf]
        %v459 = vld [vmem:[%s11 + $0x1c] sm:$0xf]
        %v460 = vld [vmem:[%s12] sm:$0x1]
        %v461 = vld [vmem:[%s435] sm:$0xff]
        %vm462 = vcmask 261120
        %v463 = vsel %vm462, %v461, 0.0
        %464 = vadd.xlane.f32.xlu0 %v463
        %v465 = vpop.xlane.xlu0 %464
        %v466 = vrcp.pop 32.0
        %v467 = vmul.f32 %v465, %v466
        %v468 = vsub.f32 %v461, %v467
        %v469 = vmul.f32 %v468, %v468
        %v470 = vsel %vm462, %v469, 0.0
        %471 = vadd.xlane.f32.xlu0 %v470
        %v472 = vpop.xlane.xlu0 %471
        %v473 = vmul.f32 %v472, %v466
        %v474 = vadd.f32 %v473, 1e-05
        %v475 = vrsqrt.pop %v474
        %v476 = vmul.f32 %v468, %v475
        %v478 = vlaneseq
        %v479 = vshrl.u32 %v478, 7
        %v480 = vsub.s32 0, %v479
        %v481 = vrot.slane %v437, %v480
        %v483 = vmul.f32 %v476, %v481
        %v485 = vlaneseq
        %v486 = vshrl.u32 %v485, 7
        %v487 = vsub.s32 0, %v486
        %v488 = vrot.slane %v438, %v487
        %v490 = vadd.f32 %v483, %v488
        %v491 = vpack.c.bf16 %v490, %v490
        %493 = vset.pattern.permute.xlu0 0
        %494 = vperm.xlu0 %493, %v443
        %v495 = vpop.permute.xlu0 %494
        %498 = vset.pattern.permute.xlu0 0
        %499 = vperm.xlu0 %498, %v444
        %v500 = vpop.permute.xlu0 %499
        %v504 = vunpack.c.l.b16 %v441
        %v505 = vunpack.c.l.b16 %v442
        %v506 = vpack.c.b16 %v505, %v504
        %vm507 = vcmask 64512
        %v509 = vsel %vm507, %v506, 0
        %vm511 = vcmask 1043456
        %v513 = vsel %vm511, %v491, 0
        %515 = vmatprep.subr.bf16.mxu0 0
        %516 = vmatpush1.bf16.msra.mxu0 %v513
        %517 = vmatprep.subr.bf16.mxu0 0
        %518 = vmatpush1.bf16.msra.mxu0 0
        %519 = vmatprep.subr.bf16.mxu0 0
        %520 = vmatpush1.bf16.msra.mxu0 0
        %521 = vmatprep.subr.bf16.mxu0 0
        %522 = vmatpush1.bf16.msra.mxu0 0
        %523 = vmatprep.subr.bf16.mxu0 0
        %524 = vmatpush1.bf16.msra.mxu0 0
        %525 = vmatprep.subr.bf16.mxu0 0
        %526 = vmatpush1.bf16.msra.mxu0 0
        %527 = vmatprep.subr.bf16.mxu0 0
        %528 = vmatpush1.bf16.msra.mxu0 0
        %529 = vmatprep.subr.bf16.mxu0 0
        %530 = vmatpush1.bf16.msra.mxu0 0
        %531 = vmatprep.subr.bf16.mxu0 0
        %532 = vmatpush1.bf16.msra.mxu0 0
        %533 = vmatprep.subr.bf16.mxu0 0
        %534 = vmatpush1.bf16.msra.mxu0 0
        %535 = vmatprep.subr.bf16.mxu0 0
        %536 = vmatpush1.bf16.msra.mxu0 0
        %537 = vmatprep.subr.bf16.mxu0 0
        %538 = vmatpush1.bf16.msra.mxu0 0
        %539 = vmatprep.subr.bf16.mxu0 0
        %540 = vmatpush1.bf16.msra.mxu0 0
        %541 = vmatprep.subr.bf16.mxu0 0
        %542 = vmatpush1.bf16.msra.mxu0 0
        %543 = vmatprep.subr.bf16.mxu0 0
        %544 = vmatpush1.bf16.msra.mxu0 0
        %545 = vmatprep.subr.bf16.mxu0 0
        %546 = vmatpush1.bf16.msra.mxu0 0
        %547 = vmatprep.mubr.bf16.mxu0 0
        %548 = vmatmul.mubr.bf16.gmra.mrb[0].mxu0 %v509
        %v549 = vpop.f32.mrb[0].mxu0
        %v550 = vadd.f32 %v495, %v549
        %v551 = vpop.f32.mrb[0].mxu0
        %v552 = vpop.f32.mrb[0].mxu0
        %v553 = vadd.f32 %v500, %v552
        %v554 = vpop.f32.mrb[0].mxu0
        %555 = vdwg.mxu0
        %v556 = vmul.f32 %v550, 0.5
        %v557 = vmul.f32 %v553, 0.5
        %v558 = vmul.f32 %v550, 0.70710677
        %v559 = vmul.f32 %v553, 0.70710677
        %v560 = verf.f32.pop %v558
        %v561 = verf.f32.pop %v559
        %v562 = vadd.f32 %v560, 1.0
        %v563 = vadd.f32 %v561, 1.0
        %v564 = vmul.f32 %v556, %v562
        %v565 = vmul.f32 %v557, %v563
        %v566 = vpack.c.bf16 %v565, %v564
        %568 = vset.pattern.permute.xlu0 0
        %569 = vperm.xlu0 %568, %v446
        %v570 = vpop.permute.xlu0 %569
        %vm572 = vcmask 130048
        %v574 = vsel %vm572, %v445, 0
        %576 = vmatprep.subr.bf16.mxu0 0
        %577 = vmatpush1.bf16.msra.mxu0 %v566
        %578 = vmatprep.subr.bf16.mxu0 0
        %579 = vmatpush1.bf16.msra.mxu0 0
        %580 = vmatprep.subr.bf16.mxu0 0
        %581 = vmatpush1.bf16.msra.mxu0 0
        %582 = vmatprep.subr.bf16.mxu0 0
        %583 = vmatpush1.bf16.msra.mxu0 0
        %584 = vmatprep.subr.bf16.mxu0 0
        %585 = vmatpush1.bf16.msra.mxu0 0
        %586 = vmatprep.subr.bf16.mxu0 0
        %587 = vmatpush1.bf16.msra.mxu0 0
        %588 = vmatprep.subr.bf16.mxu0 0
        %589 = vmatpush1.bf16.msra.mxu0 0
        %590 = vmatprep.subr.bf16.mxu0 0
        %591 = vmatpush1.bf16.msra.mxu0 0
        %592 = vmatprep.subr.bf16.mxu0 0
        %593 = vmatpush1.bf16.msra.mxu0 0
        %594 = vmatprep.subr.bf16.mxu0 0
        %595 = vmatpush1.bf16.msra.mxu0 0
        %596 = vmatprep.subr.bf16.mxu0 0
        %597 = vmatpush1.bf16.msra.mxu0 0
        %598 = vmatprep.subr.bf16.mxu0 0
        %599 = vmatpush1.bf16.msra.mxu0 0
        %600 = vmatprep.subr.bf16.mxu0 0
        %601 = vmatpush1.bf16.msra.mxu0 0
        %602 = vmatprep.subr.bf16.mxu0 0
        %603 = vmatpush1.bf16.msra.mxu0 0
        %604 = vmatprep.subr.bf16.mxu0 0
        %605 = vmatpush1.bf16.msra.mxu0 0
        %606 = vmatprep.subr.bf16.mxu0 0
        %607 = vmatpush1.bf16.msra.mxu0 0
        %608 = vmatprep.mubr.bf16.mxu0 0
        %609 = vmatmul.mubr.bf16.gmra.mrb[0].mxu0 %v574
        %v610 = vpop.f32.mrb[0].mxu0
        %v611 = vadd.f32 %v570, %v610
        %v612 = vpop.f32.mrb[0].mxu0
        %v613 = vpop.f32.mrb[0].mxu0
        %v614 = vpop.f32.mrb[0].mxu0
        %615 = vdwg.mxu0
        %v616 = vadd.f32 %v611, %v461
        %v617 = vsel %vm462, %v616, 0.0
        %618 = vadd.xlane.f32.xlu0 %v617
        %v619 = vpop.xlane.xlu0 %618
        %v620 = vmul.f32 %v619, %v466
        %v621 = vsub.f32 %v616, %v620
        %v622 = vmul.f32 %v621, %v621
        %v623 = vsel %vm462, %v622, 0.0
        %624 = vadd.xlane.f32.xlu0 %v623
        %v625 = vpop.xlane.xlu0 %624
        %v626 = vmul.f32 %v625, %v466
        %v627 = vadd.f32 %v626, 1e-05
        %v628 = vrsqrt.pop %v627
        %v629 = vmul.f32 %v621, %v628
        %v631 = vlaneseq
        %v632 = vshrl.u32 %v631, 7
        %v633 = vsub.s32 0, %v632
        %v634 = vrot.slane %v439, %v633
        %v636 = vmul.f32 %v629, %v634
        %v638 = vlaneseq
        %v639 = vshrl.u32 %v638, 7
        %v640 = vsub.s32 0, %v639
        %v641 = vrot.slane %v440, %v640
        %v643 = vadd.f32 %v636, %v641
        %v644 = vpack.c.bf16 %v643, %v643
        %v646 = vlaneseq
        %v647 = vshrl.u32 %v646, 7
        %v648 = vsub.s32 0, %v647
        %v649 = vrot.slane %v451, %v648
        %v655 = vunpack.c.l.b16 %v447
        %v656 = vunpack.c.l.b16 %v448
        %v657 = vunpack.c.l.b16 %v449
        %v658 = vunpack.c.l.b16 %v450
        %v659 = vpack.c.b16 %v656, %v655
        %v660 = vpack.c.b16 %v658, %v657
        %v664 = vsel %vm462, %v644, 0
        %666 = vmatprep.subr.bf16.mxu0 0
        %667 = vmatpush1.bf16.msra.mxu0 %v659
        %668 = vmatprep.subr.bf16.mxu0 0
        %669 = vmatpush1.bf16.msra.mxu0 %v660
        %670 = vmatprep.subr.bf16.mxu0 0
        %671 = vmatpush1.bf16.msra.mxu0 0
        %672 = vmatprep.subr.bf16.mxu0 0
        %673 = vmatpush1.bf16.msra.mxu0 0
        %674 = vmatprep.subr.bf16.mxu0 0
        %675 = vmatpush1.bf16.msra.mxu0 0
        %676 = vmatprep.subr.bf16.mxu0 0
        %677 = vmatpush1.bf16.msra.mxu0 0
        %678 = vmatprep.subr.bf16.mxu0 0
        %679 = vmatpush1.bf16.msra.mxu0 0
        %680 = vmatprep.subr.bf16.mxu0 0
        %681 = vmatpush1.bf16.msra.mxu0 0
        %682 = vmatprep.subr.bf16.mxu0 0
        %683 = vmatpush1.bf16.msra.mxu0 0
        %684 = vmatprep.subr.bf16.mxu0 0
        %685 = vmatpush1.bf16.msra.mxu0 0
        %686 = vmatprep.subr.bf16.mxu0 0
        %687 = vmatpush1.bf16.msra.mxu0 0
        %688 = vmatprep.subr.bf16.mxu0 0
        %689 = vmatpush1.bf16.msra.mxu0 0
        %690 = vmatprep.subr.bf16.mxu0 0
        %691 = vmatpush1.bf16.msra.mxu0 0
        %692 = vmatprep.subr.bf16.mxu0 0
        %693 = vmatpush1.bf16.msra.mxu0 0
        %694 = vmatprep.subr.bf16.mxu0 0
        %695 = vmatpush1.bf16.msra.mxu0 0
        %696 = vmatprep.subr.bf16.mxu0 0
        %697 = vmatpush1.bf16.msra.mxu0 0
        %698 = vmatprep.mubr.bf16.mxu0 0
        %699 = vmatmul.mubr.bf16.gmra.mrb[0].mxu0 %v664
        %v700 = vpop.f32.mrb[0].mxu0
        %v701 = vadd.f32 %v649, %v700
        %v702 = vpop.f32.mrb[0].mxu0
        %v703 = vpop.f32.mrb[0].mxu0
        %v704 = vpop.f32.mrb[0].mxu0
        %705 = vdwg.mxu0
        %v706 = vmul.f32 %v701, 0.5
        %v707 = vmul.f32 %v701, 0.70710677
        %v708 = verf.f32.pop %v707
        %v709 = vadd.f32 %v708, 1.0
        %v710 = vmul.f32 %v706, %v709
        %v711 = vpack.c.bf16 %v710, %v710
        %v713 = vlaneseq
        %v714 = vshrl.u32 %v713, 7
        %v715 = vsub.s32 0, %v714
        %v716 = vrot.slane %v460, %v715
        %v726 = vunpack.c.l.b16 %v452
        %v727 = vunpack.c.l.b16 %v453
        %v728 = vunpack.c.l.b16 %v454
        %v729 = vunpack.c.l.b16 %v455
        %v730 = vunpack.c.l.b16 %v456
        %v731 = vunpack.c.l.b16 %v457
        %v732 = vunpack.c.l.b16 %v458
        %v733 = vunpack.c.l.b16 %v459
        %v734 = vpack.c.b16 %v727, %v726
        %v735 = vpack.c.b16 %v729, %v728
        %v736 = vpack.c.b16 %v731, %v730
        %v737 = vpack.c.b16 %v733, %v732
        %vm742 = vcmask 523264
        %v744 = vsel %vm742, %v711, 0
        %746 = vmatprep.subr.bf16.mxu0 0
        %747 = vmatpush1.bf16.msra.mxu0 %v734
        %748 = vmatprep.subr.bf16.mxu0 0
        %749 = vmatpush1.bf16.msra.mxu0 %v735
        %750 = vmatprep.subr.bf16.mxu0 0
        %751 = vmatpush1.bf16.msra.mxu0 %v736
        %752 = vmatprep.subr.bf16.mxu0 0
        %753 = vmatpush1.bf16.msra.mxu0 %v737
        %754 = vmatprep.subr.bf16.mxu0 0
        %755 = vmatpush1.bf16.msra.mxu0 0
        %756 = vmatprep.subr.bf16.mxu0 0
        %757 = vmatpush1.bf16.msra.mxu0 0
        %758 = vmatprep.subr.bf16.mxu0 0
        %759 = vmatpush1.bf16.msra.mxu0 0
        %760 = vmatprep.subr.bf16.mxu0 0
        %761 = vmatpush1.bf16.msra.mxu0 0
        %762 = vmatprep.subr.bf16.mxu0 0
        %763 = vmatpush1.bf16.msra.mxu0 0
        %764 = vmatprep.subr.bf16.mxu0 0
        %765 = vmatpush1.bf16.msra.mxu0 0
        %766 = vmatprep.subr.bf16.mxu0 0
        %767 = vmatpush1.bf16.msra.mxu0 0
        %768 = vmatprep.subr.bf16.mxu0 0
        %769 = vmatpush1.bf16.msra.mxu0 0
        %770 = vmatprep.subr.bf16.mxu0 0
        %771 = vmatpush1.bf16.msra.mxu0 0
        %772 = vmatprep.subr.bf16.mxu0 0
        %773 = vmatpush1.bf16.msra.mxu0 0
        %774 = vmatprep.subr.bf16.mxu0 0
        %775 = vmatpush1.bf16.msra.mxu0 0
        %776 = vmatprep.subr.bf16.mxu0 0
        %777 = vmatpush1.bf16.msra.mxu0 0
        %778 = vmatprep.mubr.bf16.mxu0 0
        %779 = vmatmul.mubr.bf16.gmra.mrb[0].mxu0 %v744
        %v780 = vpop.f32.mrb[0].mxu0
        %v781 = vadd.f32 %v716, %v780
        %v782 = vpop.f32.mrb[0].mxu0
        %v783 = vpop.f32.mrb[0].mxu0
        %v784 = vpop.f32.mrb[0].mxu0
        %785 = vdwg.mxu0
        %v786 = vadd.f32 %v781, %v616
        %787 = vst.msk [vmem:[%s431] sm:$0xff] %vm462, %v786
        %s788 = sand.u32 %s313, 1
        %s789 = scalar_lea.sflag [#allocation3], %s788
        %s790 = sand.u32 %s313, 1
        %s791 = smul.addr %s790, 8
        %s792 = scalar_lea.vmem [#allocation2], %s791
        // Predicated region
        $region73: #{tpu_custom_call.1} parent=71 // pred_check
          %p793 = pneg %p323
        $region74: #{tpu_custom_call.1} parent=71 // pred_check_branch
          %795 = sbr.rel (%p793) target = $region76
        $region75: #{tpu_custom_call.1} parent=71 // pred_region
          %s797 = ssub.s32 128, 128
          %798 = vsyncadd %s789, %s797
          %s799 = smul.addr %s27, 128
          %s800 = scalar_lea.hbm %s13, %s799
          %s802 = sshll.u32 %s792, 4
          %s803 = int_to_ptr.vmem [resolvable:$true] %s802
          %805 = dma.vmem_to_hbm [thread:$0]  %s803, 128, %s800, %s789
        $region76: #{tpu_custom_call.1} parent=71 // pred_fallthru
          _
      $region72: #{tpu_custom_call.1} parent=5 // pred_fallthru
        _
      %p806 = scmp.le.s32.totalorder 2, %s22
      // Predicated region
      $region77: #{tpu_custom_call.1} parent=5 // pred_check
        %p807 = pneg %p806
      $region78: #{tpu_custom_call.1} parent=5 // pred_check_branch
        %809 = sbr.rel (%p807) target = $region80
      $region79: #{tpu_custom_call.1} parent=5 // pred_region
        %s810 = ssub.s32 %s22, 2
        // Predicated region
        $region81: #{tpu_custom_call.1} parent=79 // pred_check
          %p811 = pneg %p329
        $region82: #{tpu_custom_call.1} parent=79 // pred_check_branch
          %813 = sbr.rel (%p811) target = $region84
        $region83: #{tpu_custom_call.1} parent=79 // pred_region
          %s814 = sand.u32 %s314, 1
          %s815 = scalar_lea.sflag [#allocation3], %s814
          %s816 = sand.u32 %s314, 1
          %s817 = smul.addr %s816, 8
          %s818 = scalar_lea.vmem [#allocation2], %s817
          %819 = dma.done %s815, 128
        $region84: #{tpu_custom_call.1} parent=79 // pred_fallthru
          _
      $region80: #{tpu_custom_call.1} parent=5 // pred_fallthru
        _
    $region6: #{tpu_custom_call.1} parent=1 // loop_footer
      %s26 = sadd.s32 1, %s22
    $region7: #{tpu_custom_call.1} parent=1 // loop_footer_branch
      %21 = sbr.rel target = $region3
    $region8: #{tpu_custom_call.1} parent=1 // loop_exit
      _
    %820 = vsyncpa [#allocation3], 1
    %s821 = scalar_lea.sflag [#allocation3], 1
    %822 = vsyncpa %s821, 1

// kernel: tpu_custom_call.1
$region0: #{tpu_custom_call.1}
  #allocation0 [shape = 'u32[]', space=smem, size = 0x4, offset = 0x4, fixed_abs, tag = 'smem constant byte address 0x4 - core index']
  #allocation1 [shape = 'u32[144,128]{1,0:T(1,128)}', space=vmem, size = 0x12000, scoped, tag = 'internal scratch']
  %s0 = inlined_call_operand.vmem [shape: f32[2,8,32], index: 0, kind: input, shape index: {}]
  %s1 = inlined_call_operand.vmem [shape: f32[1,32], index: 1, kind: input, shape index: {}]
  %s2 = inlined_call_operand.vmem [shape: f32[1,32], index: 2, kind: input, shape index: {}]
  %s3 = inlined_call_operand.vmem [shape: bf16[16,8], index: 3, kind: input, shape index: {}]
  %s4 = inlined_call_operand.vmem [shape: f32[16,1], index: 4, kind: input, shape index: {}]
  %s5 = inlined_call_operand.vmem [shape: bf16[8,16], index: 5, kind: input, shape index: {}]
  %s6 = inlined_call_operand.vmem [shape: f32[8,1], index: 6, kind: input, shape index: {}]
  %s7 = inlined_call_operand.vmem [shape: f32[1,32], index: 7, kind: input, shape index: {}]
  %s8 = inlined_call_operand.vmem [shape: f32[1,32], index: 8, kind: input, shape index: {}]
  %s9 = inlined_call_operand.vmem [shape: bf16[32,64], index: 9, kind: input, shape index: {}]
  %s10 = inlined_call_operand.vmem [shape: f32[1,64], index: 10, kind: input, shape index: {}]
  %s11 = inlined_call_operand.vmem [shape: bf16[64,32], index: 11, kind: input, shape index: {}]
  %s12 = inlined_call_operand.vmem [shape: f32[1,32], index: 12, kind: input, shape index: {}]
  %s13 = inlined_call_operand.hbm [shape: f32[2,8,32], index: 13, kind: output, shape index: {}]
  %s14 = sld [smem:[#allocation0]]
  $region85: #{tpu_custom_call.1} parent=0
    _
  %s16 = ssub.s32 1, %s14
  %s17 = scalar_select 0, %s16, %s14
  $region1: #{tpu_custom_call.1} parent=0
    #allocation2 [shape = 'u8[8192]{0}', space=vmem, size = 0x2000, scoped, tag = 'output window, operand 0']
    #allocation3 [shape = 's32[2]{0}', space=sflag, size = 0x8, scoped, tag = 'scoped memory for tpu_custom_call.1']
    %18 = vsyncpa [#allocation3], 0
    %s19 = scalar_lea.sflag [#allocation3], 1
    %20 = vsyncpa %s19, 0
    loop: start=0, step=1, limit=4
    $region2: #{tpu_custom_call.1} parent=1 // loop_pre_header
      _
    $region3: #{tpu_custom_call.1} parent=1 // loop_header
      %s22 = sphi 0, %s26
      %p23 = scmp.ge.s32.totalorder %s22, 4
      %s32 = sphi 0, %s34
      %s35 = sphi 0, %s32
      %s36 = sphi 0, %s35
      %s52 = sphi 0, %s36
      %s56 = sphi 0, %s56
      %s58 = sphi 0, %s56
      %s59 = sphi 0, %s58
      %s73 = sphi 0, %s59
      %s77 = sphi 0, %s77
      %s79 = sphi 0, %s77
      %s80 = sphi 0, %s79
      %s94 = sphi 0, %s80
      %s98 = sphi 0, %s98
      %s100 = sphi 0, %s98
      %s101 = sphi 0, %s100
      %s115 = sphi 0, %s101
      %s119 = sphi 0, %s119
      %s121 = sphi 0, %s119
      %s122 = sphi 0, %s121
      %s136 = sphi 0, %s122
      %s140 = sphi 0, %s140
      %s142 = sphi 0, %s140
      %s143 = sphi 0, %s142
      %s157 = sphi 0, %s143
      %s161 = sphi 0, %s161
      %s163 = sphi 0, %s161
      %s164 = sphi 0, %s163
      %s178 = sphi 0, %s164
      %s182 = sphi 0, %s182
      %s184 = sphi 0, %s182
      %s185 = sphi 0, %s184
      %s199 = sphi 0, %s185
      %s203 = sphi 0, %s203
      %s205 = sphi 0, %s203
      %s206 = sphi 0, %s205
      %s220 = sphi 0, %s206
      %s224 = sphi 0, %s224
      %s226 = sphi 0, %s224
      %s227 = sphi 0, %s226
      %s241 = sphi 0, %s227
      %s245 = sphi 0, %s245
      %s247 = sphi 0, %s245
      %s248 = sphi 0, %s247
      %s262 = sphi 0, %s248
      %s266 = sphi 0, %s266
      %s268 = sphi 0, %s266
      %s269 = sphi 0, %s268
      %s283 = sphi 0, %s269
      %s287 = sphi 0, %s287
      %s289 = sphi 0, %s287
      %s290 = sphi 0, %s289
      %s304 = sphi 0, %s290
      %s310 = sphi 0, %s312
      %s313 = sphi 0, %s310
      %s314 = sphi 0, %s313
      %s330 = sphi 0, %s314
    $region4: #{tpu_custom_call.1} parent=1 // loop_header_branch
      %25 = sbr.rel (%p23) target = $region8
    $region5: #{tpu_custom_call.1} parent=1 // loop_body
      %s27 = ssub.s32 %s22, 1
      %s28 = ssub.s32 %s22, 2
      %s29 = sadd.s32 %s22, 1
      %s30 = ssub.s32 %s22, %s29
      %p31 = scmp.eq.s32.totalorder %s30, 0
      %s33 = sadd.s32 %s32, 1
      %s34 = scalar_select %p31, %s32, %s33
      %p37 = pneg %p31
      %p38 = scmp.eq.s32.totalorder %s22, 1
      %p39 = por %p37, %p38
      %p40 = scmp.ne.s32.totalorder %s32, %s35
      %p41 = scmp.eq.s32.totalorder %s22, 0
      %p42 = por %p40, %p41
      %p43 = scmp.ne.s32.totalorder %s32, %s35
      %p44 = scmp.eq.s32.totalorder %s27, 1
      %p45 = por %p43, %p44
      %p46 = scmp.ne.s32.totalorder %s35, %s36
      %p47 = scmp.eq.s32.totalorder %s27, 0
      %p48 = por %p46, %p47
      %p49 = scmp.ne.s32.totalorder %s35, %s36
      %p50 = scmp.eq.s32.totalorder %s28, 1
      %p51 = por %p49, %p50
      %p53 = scmp.ne.s32.totalorder %s36, %s52
      %p54 = scmp.eq.s32.totalorder %s28, 0
      %p55 = por %p53, %p54
      %s57 = sadd.s32 %s56, 1
      %p60 = scmp.eq.s32.totalorder %s22, 1
      %p61 = scmp.ne.s32.totalorder %s56, %s58
      %p62 = scmp.eq.s32.totalorder %s22, 0
      %p63 = por %p61, %p62
      %p64 = scmp.ne.s32.totalorder %s56, %s58
      %p65 = scmp.eq.s32.totalorder %s27, 1
      %p66 = por %p64, %p65
      %p67 = scmp.ne.s32.totalorder %s58, %s59
      %p68 = scmp.eq.s32.totalorder %s27, 0
      %p69 = por %p67, %p68
      %p70 = scmp.ne.s32.totalorder %s58, %s59
      %p71 = scmp.eq.s32.totalorder %s28, 1
      %p72 = por %p70, %p71
      %p74 = scmp.ne.s32.totalorder %s59, %s73
      %p75 = scmp.eq.s32.totalorder %s28, 0
      %p76 = por %p74, %p75
      %s78 = sadd.s32 %s77, 1
      %p81 = scmp.eq.s32.totalorder %s22, 1
      %p82 = scmp.ne.s32.totalorder %s77, %s79
      %p83 = scmp.eq.s32.totalorder %s22, 0
      %p84 = por %p82, %p83
      %p85 = scmp.ne.s32.totalorder %s77, %s79
      %p86 = scmp.eq.s32.totalorder %s27, 1
      %p87 = por %p85, %p86
      %p88 = scmp.ne.s32.totalorder %s79, %s80
      %p89 = scmp.eq.s32.totalorder %s27, 0
      %p90 = por %p88, %p89
      %p91 = scmp.ne.s32.totalorder %s79, %s80
      %p92 = scmp.eq.s32.totalorder %s28, 1
      %p93 = por %p91, %p92
      %p95 = scmp.ne.s32.totalorder %s80, %s94
      %p96 = scmp.eq.s32.totalorder %s28, 0
      %p97 = por %p95, %p96
      %s99 = sadd.s32 %s98, 1
      %p102 = scmp.eq.s32.totalorder %s22, 1
      %p103 = scmp.ne.s32.totalorder %s98, %s100
      %p104 = scmp.eq.s32.totalorder %s22, 0
      %p105 = por %p103, %p104
      %p106 = scmp.ne.s32.totalorder %s98, %s100
      %p107 = scmp.eq.s32.totalorder %s27, 1
      %p108 = por %p106, %p107
      %p109 = scmp.ne.s32.totalorder %s100, %s101
      %p110 = scmp.eq.s32.totalorder %s27, 0
      %p111 = por %p109, %p110
      %p112 = scmp.ne.s32.totalorder %s100, %s101
      %p113 = scmp.eq.s32.totalorder %s28, 1
      %p114 = por %p112, %p113
      %p116 = scmp.ne.s32.totalorder %s101, %s115
      %p117 = scmp.eq.s32.totalorder %s28, 0
      %p118 = por %p116, %p117
      %s120 = sadd.s32 %s119, 1
      %p123 = scmp.eq.s32.totalorder %s22, 1
      %p124 = scmp.ne.s32.totalorder %s119, %s121
      %p125 = scmp.eq.s32.totalorder %s22, 0
      %p126 = por %p124, %p125
      %p127 = scmp.ne.s32.totalorder %s119, %s121
      %p128 = scmp.eq.s32.totalorder %s27, 1
      %p129 = por %p127, %p128
      %p130 = scmp.ne.s32.totalorder %s121, %s122
      %p131 = scmp.eq.s32.totalorder %s27, 0
      %p132 = por %p130, %p131
      %p133 = scmp.ne.s32.totalorder %s121, %s122
      %p134 = scmp.eq.s32.totalorder %s28, 1
      %p135 = por %p133, %p134
      %p137 = scmp.ne.s32.totalorder %s122, %s136
      %p138 = scmp.eq.s32.totalorder %s28, 0
      %p139 = por %p137, %p138
      %s141 = sadd.s32 %s140, 1
      %p144 = scmp.eq.s32.totalorder %s22, 1
      %p145 = scmp.ne.s32.totalorder %s140, %s142
      %p146 = scmp.eq.s32.totalorder %s22, 0
      %p147 = por %p145, %p146
      %p148 = scmp.ne.s32.totalorder %s140, %s142
      %p149 = scmp.eq.s32.totalorder %s27, 1
      %p150 = por %p148, %p149
      %p151 = scmp.ne.s32.totalorder %s142, %s143
      %p152 = scmp.eq.s32.totalorder %s27, 0
      %p153 = por %p151, %p152
      %p154 = scmp.ne.s32.totalorder %s142, %s143
      %p155 = scmp.eq.s32.totalorder %s28, 1
      %p156 = por %p154, %p155
      %p158 = scmp.ne.s32.totalorder %s143, %s157
      %p159 = scmp.eq.s32.totalorder %s28, 0
      %p160 = por %p158, %p159
      %s162 = sadd.s32 %s161, 1
      %p165 = scmp.eq.s32.totalorder %s22, 1
      %p166 = scmp.ne.s32.totalorder %s161, %s163
      %p167 = scmp.eq.s32.totalorder %s22, 0
      %p168 = por %p166, %p167
      %p169 = scmp.ne.s32.totalorder %s161, %s163
      %p170 = scmp.eq.s32.totalorder %s27, 1
      %p171 = por %p169, %p170
      %p172 = scmp.ne.s32.totalorder %s163, %s164
      %p173 = scmp.eq.s32.totalorder %s27, 0
      %p174 = por %p172, %p173
      %p175 = scmp.ne.s32.totalorder %s163, %s164
      %p176 = scmp.eq.s32.totalorder %s28, 1
      %p177 = por %p175, %p176
      %p179 = scmp.ne.s32.totalorder %s164, %s178
      %p180 = scmp.eq.s32.totalorder %s28, 0
      %p181 = por %p179, %p180
      %s183 = sadd.s32 %s182, 1
      %p186 = scmp.eq.s32.totalorder %s22, 1
      %p187 = scmp.ne.s32.totalorder %s182, %s184
      %p188 = scmp.eq.s32.totalorder %s22, 0
      %p189 = por %p187, %p188
      %p190 = scmp.ne.s32.totalorder %s182, %s184
      %p191 = scmp.eq.s32.totalorder %s27, 1
      %p192 = por %p190, %p191
      %p193 = scmp.ne.s32.totalorder %s184, %s185
      %p194 = scmp.eq.s32.totalorder %s27, 0
      %p195 = por %p193, %p194
      %p196 = scmp.ne.s32.totalorder %s184, %s185
      %p197 = scmp.eq.s32.totalorder %s28, 1
      %p198 = por %p196, %p197
      %p200 = scmp.ne.s32.totalorder %s185, %s199
      %p201 = scmp.eq.s32.totalorder %s28, 0
      %p202 = por %p200, %p201
      %s204 = sadd.s32 %s203, 1
      %p207 = scmp.eq.s32.totalorder %s22, 1
      %p208 = scmp.ne.s32.totalorder %s203, %s205
      %p209 = scmp.eq.s32.totalorder %s22, 0
      %p210 = por %p208, %p209
      %p211 = scmp.ne.s32.totalorder %s203, %s205
      %p212 = scmp.eq.s32.totalorder %s27, 1
      %p213 = por %p211, %p212
      %p214 = scmp.ne.s32.totalorder %s205, %s206
      %p215 = scmp.eq.s32.totalorder %s27, 0
      %p216 = por %p214, %p215
      %p217 = scmp.ne.s32.totalorder %s205, %s206
      %p218 = scmp.eq.s32.totalorder %s28, 1
      %p219 = por %p217, %p218
      %p221 = scmp.ne.s32.totalorder %s206, %s220
      %p222 = scmp.eq.s32.totalorder %s28, 0
      %p223 = por %p221, %p222
      %s225 = sadd.s32 %s224, 1
      %p228 = scmp.eq.s32.totalorder %s22, 1
      %p229 = scmp.ne.s32.totalorder %s224, %s226
      %p230 = scmp.eq.s32.totalorder %s22, 0
      %p231 = por %p229, %p230
      %p232 = scmp.ne.s32.totalorder %s224, %s226
      %p233 = scmp.eq.s32.totalorder %s27, 1
      %p234 = por %p232, %p233
      %p235 = scmp.ne.s32.totalorder %s226, %s227
      %p236 = scmp.eq.s32.totalorder %s27, 0
      %p237 = por %p235, %p236
      %p238 = scmp.ne.s32.totalorder %s226, %s227
      %p239 = scmp.eq.s32.totalorder %s28, 1
      %p240 = por %p238, %p239
      %p242 = scmp.ne.s32.totalorder %s227, %s241
      %p243 = scmp.eq.s32.totalorder %s28, 0
      %p244 = por %p242, %p243
      %s246 = sadd.s32 %s245, 1
      %p249 = scmp.eq.s32.totalorder %s22, 1
      %p250 = scmp.ne.s32.totalorder %s245, %s247
      %p251 = scmp.eq.s32.totalorder %s22, 0
      %p252 = por %p250, %p251
      %p253 = scmp.ne.s32.totalorder %s245, %s247
      %p254 = scmp.eq.s32.totalorder %s27, 1
      %p255 = por %p253, %p254
      %p256 = scmp.ne.s32.totalorder %s247, %s248
      %p257 = scmp.eq.s32.totalorder %s27, 0
      %p258 = por %p256, %p257
      %p259 = scmp.ne.s32.totalorder %s247, %s248
      %p260 = scmp.eq.s32.totalorder %s28, 1
      %p261 = por %p259, %p260
      %p263 = scmp.ne.s32.totalorder %s248, %s262
      %p264 = scmp.eq.s32.totalorder %s28, 0
      %p265 = por %p263, %p264
      %s267 = sadd.s32 %s266, 1
      %p270 = scmp.eq.s32.totalorder %s22, 1
      %p271 = scmp.ne.s32.totalorder %s266, %s268
      %p272 = scmp.eq.s32.totalorder %s22, 0
      %p273 = por %p271, %p272
      %p274 = scmp.ne.s32.totalorder %s266, %s268
      %p275 = scmp.eq.s32.totalorder %s27, 1
      %p276 = por %p274, %p275
      %p277 = scmp.ne.s32.totalorder %s268, %s269
      %p278 = scmp.eq.s32.totalorder %s27, 0
      %p279 = por %p277, %p278
      %p280 = scmp.ne.s32.totalorder %s268, %s269
      %p281 = scmp.eq.s32.totalorder %s28, 1
      %p282 = por %p280, %p281
      %p284 = scmp.ne.s32.totalorder %s269, %s283
      %p285 = scmp.eq.s32.totalorder %s28, 0
      %p286 = por %p284, %p285
      %s288 = sadd.s32 %s287, 1
      %p291 = scmp.eq.s32.totalorder %s22, 1
      %p292 = scmp.ne.s32.totalorder %s287, %s289
      %p293 = scmp.eq.s32.totalorder %s22, 0
      %p294 = por %p292, %p293
      %p295 = scmp.ne.s32.totalorder %s287, %s289
      %p296 = scmp.eq.s32.totalorder %s27, 1
      %p297 = por %p295, %p296
      %p298 = scmp.ne.s32.totalorder %s289, %s290
      %p299 = scmp.eq.s32.totalorder %s27, 0
      %p300 = por %p298, %p299
      %p301 = scmp.ne.s32.totalorder %s289, %s290
      %p302 = scmp.eq.s32.totalorder %s28, 1
      %p303 = por %p301, %p302
      %p305 = scmp.ne.s32.totalorder %s290, %s304
      %p306 = scmp.eq.s32.totalorder %s28, 0
      %p307 = por %p305, %p306
      %s308 = ssub.s32 %s22, %s29
      %p309 = scmp.eq.s32.totalorder %s308, 0
      %s311 = sadd.s32 %s310, 1
      %s312 = scalar_select %p309, %s310, %s311
      %p315 = pneg %p309
      %p316 = scmp.eq.s32.totalorder %s22, 1
      %p317 = por %p315, %p316
      %p318 = scmp.ne.s32.totalorder %s310, %s313
      %p319 = scmp.eq.s32.totalorder %s22, 0
      %p320 = por %p318, %p319
      %p321 = scmp.ne.s32.totalorder %s310, %s313
      %p322 = scmp.eq.s32.totalorder %s27, 1
      %p323 = por %p321, %p322
      %p324 = scmp.ne.s32.totalorder %s313, %s314
      %p325 = scmp.eq.s32.totalorder %s27, 0
      %p326 = por %p324, %p325
      %p327 = scmp.ne.s32.totalorder %s313, %s314
      %p328 = scmp.eq.s32.totalorder %s28, 1
      %p329 = por %p327, %p328
      %p331 = scmp.ne.s32.totalorder %s314, %s330
      %p332 = scmp.eq.s32.totalorder %s28, 0
      %p333 = por %p331, %p332
      %p334 = scmp.le.s32.totalorder 1, %s22
      %p335 = scmp.lt.s32.totalorder %s22, 3
      %p336 = pnand %p334, %p335
      %p337 = pneg %p336
      // Predicated region
      $region9: #{tpu_custom_call.1} parent=5 // pred_check
        _
      $region10: #{tpu_custom_call.1} parent=5 // pred_check_branch
        %339 = sbr.rel (%p336) target = $region12
      $region11: #{tpu_custom_call.1} parent=5 // pred_region
        %s340 = ssub.s32 %s22, 1
        // Predicated region
        $region13: #{tpu_custom_call.1} parent=11 // pred_check
          %p341 = pneg %p69
        $region14: #{tpu_custom_call.1} parent=11 // pred_check_branch
          %343 = sbr.rel (%p341) target = $region16
        $region15: #{tpu_custom_call.1} parent=11 // pred_region
          _
        $region16: #{tpu_custom_call.1} parent=11 // pred_fallthru
          _
        // Predicated region
        $region17: #{tpu_custom_call.1} parent=11 // pred_check
          %p344 = pneg %p90
        $region18: #{tpu_custom_call.1} parent=11 // pred_check_branch
          %346 = sbr.rel (%p344) target = $region20
        $region19: #{tpu_custom_call.1} parent=11 // pred_region
          _
        $region20: #{tpu_custom_call.1} parent=11 // pred_fallthru
          _
        // Predicated region
        $region21: #{tpu_custom_call.1} parent=11 // pred_check
          %p347 = pneg %p111
        $region22: #{tpu_custom_call.1} parent=11 // pred_check_branch
          %349 = sbr.rel (%p347) target = $region24
        $region23: #{tpu_custom_call.1} parent=11 // pred_region
          _
        $region24: #{tpu_custom_call.1} parent=11 // pred_fallthru
          _
        // Predicated region
        $region25: #{tpu_custom_call.1} parent=11 // pred_check
          %p350 = pneg %p132
        $region26: #{tpu_custom_call.1} parent=11 // pred_check_branch
          %352 = sbr.rel (%p350) target = $region28
        $region27: #{tpu_custom_call.1} parent=11 // pred_region
          _
        $region28: #{tpu_custom_call.1} parent=11 // pred_fallthru
          _
        // Predicated region
        $region29: #{tpu_custom_call.1} parent=11 // pred_check
          %p353 = pneg %p153
        $region30: #{tpu_custom_call.1} parent=11 // pred_check_branch
          %355 = sbr.rel (%p353) target = $region32
        $region31: #{tpu_custom_call.1} parent=11 // pred_region
          _
        $region32: #{tpu_custom_call.1} parent=11 // pred_fallthru
          _
        // Predicated region
        $region33: #{tpu_custom_call.1} parent=11 // pred_check
          %p356 = pneg %p174
        $region34: #{tpu_custom_call.1} parent=11 // pred_check_branch
          %358 = sbr.rel (%p356) target = $region36
        $region35: #{tpu_custom_call.1} parent=11 // pred_region
          _
        $region36: #{tpu_custom_call.1} parent=11 // pred_fallthru
          _
        // Predicated region
        $region37: #{tpu_custom_call.1} parent=11 // pred_check
          %p359 = pneg %p195
        $region38: #{tpu_custom_call.1} parent=11 // pred_check_branch
          %361 = sbr.rel (%p359) target = $region40
        $region39: #{tpu_custom_call.1} parent=11 // pred_region
          _
        $region40: #{tpu_custom_call.1} parent=11 // pred_fallthru
          _
        // Predicated region
        $region41: #{tpu_custom_call.1} parent=11 // pred_check
          %p362 = pneg %p216
        $region42: #{tpu_custom_call.1} parent=11 // pred_check_branch
          %364 = sbr.rel (%p362) target = $region44
        $region43: #{tpu_custom_call.1} parent=11 // pred_region
          _
        $region44: #{tpu_custom_call.1} parent=11 // pred_fallthru
          _
        // Predicated region
        $region45: #{tpu_custom_call.1} parent=11 // pred_check
          %p365 = pneg %p237
        $region46: #{tpu_custom_call.1} parent=11 // pred_check_branch
          %367 = sbr.rel (%p365) target = $region48
        $region47: #{tpu_custom_call.1} parent=11 // pred_region
          _
        $region48: #{tpu_custom_call.1} parent=11 // pred_fallthru
          _
        // Predicated region
        $region49: #{tpu_custom_call.1} parent=11 // pred_check
          %p368 = pneg %p258
        $region50: #{tpu_custom_call.1} parent=11 // pred_check_branch
          %370 = sbr.rel (%p368) target = $region52
        $region51: #{tpu_custom_call.1} parent=11 // pred_region
          _
        $region52: #{tpu_custom_call.1} parent=11 // pred_fallthru
          _
        // Predicated region
        $region53: #{tpu_custom_call.1} parent=11 // pred_check
          %p371 = pneg %p279
        $region54: #{tpu_custom_call.1} parent=11 // pred_check_branch
          %373 = sbr.rel (%p371) target = $region56
        $region55: #{tpu_custom_call.1} parent=11 // pred_region
          _
        $region56: #{tpu_custom_call.1} parent=11 // pred_fallthru
          _
        // Predicated region
        $region57: #{tpu_custom_call.1} parent=11 // pred_check
          %p374 = pneg %p300
        $region58: #{tpu_custom_call.1} parent=11 // pred_check_branch
          %376 = sbr.rel (%p374) target = $region60
        $region59: #{tpu_custom_call.1} parent=11 // pred_region
          _
        $region60: #{tpu_custom_call.1} parent=11 // pred_fallthru
          _
      $region12: #{tpu_custom_call.1} parent=5 // pred_fallthru
        _
      %p377 = scmp.lt.s32.totalorder %s22, 2
      // Predicated region
      $region61: #{tpu_custom_call.1} parent=5 // pred_check
        %p378 = pneg %p377
      $region62: #{tpu_custom_call.1} parent=5 // pred_check_branch
        %380 = sbr.rel (%p378) target = $region64
      $region63: #{tpu_custom_call.1} parent=5 // pred_region
        // Predicated region
        $region65: #{tpu_custom_call.1} parent=63 // pred_check
          %p381 = pneg %p42
        $region66: #{tpu_custom_call.1} parent=63 // pred_check_branch
          %383 = sbr.rel (%p381) target = $region68
        $region67: #{tpu_custom_call.1} parent=63 // pred_region
          %p384 = scmp.lt.s32.totalorder %s22, 1
          %s385 = scalar_select %p384, %s22, 1
          %s386 = smul.addr %s385, 8
          %s387 = scalar_lea.vmem %s0, %s386
        $region68: #{tpu_custom_call.1} parent=63 // pred_fallthru
          _
      $region64: #{tpu_custom_call.1} parent=5 // pred_fallthru
        _
      %p388 = scmp.le.s32.totalorder 1, %s22
      %p389 = scmp.lt.s32.totalorder %s22, 3
      %p390 = pnand %p388, %p389
      %p391 = pneg %p390
      // Predicated region
      $region69: #{tpu_custom_call.1} parent=5 // pred_check
        _
      $region70: #{tpu_custom_call.1} parent=5 // pred_check_branch
        %393 = sbr.rel (%p390) target = $region72
      $region71: #{tpu_custom_call.1} parent=5 // pred_region
        %s394 = ssub.s32 %s22, 1
        %p395 = scmp.lt.s32.totalorder %s27, 1
        %s396 = scalar_select %p395, %s27, 1
        %s397 = smul.addr %s396, 8
        %s398 = scalar_lea.vmem %s0, %s397
        %p399 = pneg %p48
        %p400 = pneg %p45
        %p401 = pneg %p69
        %p402 = pneg %p66
        %p403 = pneg %p90
        %p404 = pneg %p87
        %p405 = pneg %p111
        %p406 = pneg %p108
        %p407 = pneg %p132
        %p408 = pneg %p129
        %p409 = pneg %p153
        %p410 = pneg %p150
        %p411 = pneg %p174
        %p412 = pneg %p171
        %p413 = pneg %p195
        %p414 = pneg %p192
        %p415 = pneg %p216
        %p416 = pneg %p213
        %p417 = pneg %p237
        %p418 = pneg %p234
        %p419 = pneg %p258
        %p420 = pneg %p255
        %p421 = pneg %p279
        %p422 = pneg %p276
        %p423 = pneg %p300
        %p424 = pneg %p297
        %p425 = pneg %p326
        %p426 = pneg %p323
        %s427 = sand.u32 %s313, 1
        %s428 = scalar_lea.sflag [#allocation3], %s427
        %s429 = sand.u32 %s313, 1
        %s430 = smul.addr %s429, 8
        %s431 = scalar_lea.vmem [#allocation2], %s430
        %p432 = scmp.lt.s32.totalorder %s27, 1
        %s433 = scalar_select %p432, %s27, 1
        %s434 = smul.addr %s433, 8
        %s435 = scalar_lea.vmem %s0, %s434
        %v437 = vld [vmem:[%s1] sm:$0x1]
        %v438 = vld [vmem:[%s2] sm:$0x1]
        %v439 = vld [vmem:[%s7] sm:$0x1]
        %v440 = vld [vmem:[%s8] sm:$0x1]
        %v441 = vld [vmem:[%s3] sm:$0xf]
        %v442 = vld [vmem:[%s3 + $0x4] sm:$0xf]
        %v443 = vld [vmem:[%s4] sm:$0xff]
        %v444 = vld [vmem:[%s4 + $0x8] sm:$0xff]
        %v445 = vld [vmem:[%s5] sm:$0xf]
        %v446 = vld [vmem:[%s6] sm:$0xff]
        %v447 = vld [vmem:[%s9] sm:$0xf]
        %v448 = vld [vmem:[%s9 + $0x4] sm:$0xf]
        %v449 = vld [vmem:[%s9 + $0x8] sm:$0xf]
        %v450 = vld [vmem:[%s9 + $0xc] sm:$0xf]
        %v451 = vld [vmem:[%s10] sm:$0x1]
        %v452 = vld [vmem:[%s11] sm:$0xf]
        %v453 = vld [vmem:[%s11 + $0x4] sm:$0xf]
        %v454 = vld [vmem:[%s11 + $0x8] sm:$0xf]
        %v455 = vld [vmem:[%s11 + $0xc] sm:$0xf]
        %v456 = vld [vmem:[%s11 + $0x10] sm:$0xf]
        %v457 = vld [vmem:[%s11 + $0x14] sm:$0xf]
        %v458 = vld [vmem:[%s11 + $0x18] sm:$0xf]
        %v459 = vld [vmem:[%s11 + $0x1c] sm:$0xf]
        %v460 = vld [vmem:[%s12] sm:$0x1]
        %v461 = vld [vmem:[%s435] sm:$0xff]
        %vm462 = vcmask 261120
        %v463 = vsel %vm462, %v461, 0.0
        %464 = vadd.xlane.f32.xlu0 %v463
        %v465 = vpop.xlane.xlu0 %464
        %v466 = vrcp.pop 32.0
        %v467 = vmul.f32 %v465, %v466
        %v468 = vsub.f32 %v461, %v467
        %v469 = vmul.f32 %v468, %v468
        %v470 = vsel %vm462, %v469, 0.0
        %471 = vadd.xlane.f32.xlu0 %v470
        %v472 = vpop.xlane.xlu0 %471
        %v473 = vmul.f32 %v472, %v466
        %v474 = vadd.f32 %v473, 1e-05
        %v475 = vrsqrt.pop %v474
        %v476 = vmul.f32 %v468, %v475
        %v478 = vlaneseq
        %v479 = vshrl.u32 %v478, 7
        %v480 = vsub.s32 0, %v479
        %v481 = vrot.slane %v437, %v480
        %v483 = vmul.f32 %v476, %v481
        %v485 = vlaneseq
        %v486 = vshrl.u32 %v485, 7
        %v487 = vsub.s32 0, %v486
        %v488 = vrot.slane %v438, %v487
        %v490 = vadd.f32 %v483, %v488
        %v491 = vpack.c.bf16 %v490, %v490
        %493 = vset.pattern.permute.xlu0 0
        %494 = vperm.xlu0 %493, %v443
        %v495 = vpop.permute.xlu0 %494
        %498 = vset.pattern.permute.xlu0 0
        %499 = vperm.xlu0 %498, %v444
        %v500 = vpop.permute.xlu0 %499
        %v504 = vunpack.c.l.b16 %v441
        %v505 = vunpack.c.l.b16 %v442
        %v506 = vpack.c.b16 %v505, %v504
        %vm507 = vcmask 64512
        %v509 = vsel %vm507, %v506, 0
        %vm511 = vcmask 1043456
        %v513 = vsel %vm511, %v491, 0
        %515 = vmatprep.subr.bf16.mxu0 0
        %516 = vmatpush1.bf16.msra.mxu0 %v513
        %517 = vmatprep.subr.bf16.mxu0 0
        %518 = vmatpush1.bf16.msra.mxu0 0
        %519 = vmatprep.subr.bf16.mxu0 0
        %520 = vmatpush1.bf16.msra.mxu0 0
        %521 = vmatprep.subr.bf16.mxu0 0
        %522 = vmatpush1.bf16.msra.mxu0 0
        %523 = vmatprep.subr.bf16.mxu0 0
        %524 = vmatpush1.bf16.msra.mxu0 0
        %525 = vmatprep.subr.bf16.mxu0 0
        %526 = vmatpush1.bf16.msra.mxu0 0
        %527 = vmatprep.subr.bf16.mxu0 0
        %528 = vmatpush1.bf16.msra.mxu0 0
        %529 = vmatprep.subr.bf16.mxu0 0
        %530 = vmatpush1.bf16.msra.mxu0 0
        %531 = vmatprep.subr.bf16.mxu0 0
        %532 = vmatpush1.bf16.msra.mxu0 0
        %533 = vmatprep.subr.bf16.mxu0 0
        %534 = vmatpush1.bf16.msra.mxu0 0
        %535 = vmatprep.subr.bf16.mxu0 0
        %536 = vmatpush1.bf16.msra.mxu0 0
        %537 = vmatprep.subr.bf16.mxu0 0
        %538 = vmatpush1.bf16.msra.mxu0 0
        %539 = vmatprep.subr.bf16.mxu0 0
        %540 = vmatpush1.bf16.msra.mxu0 0
        %541 = vmatprep.subr.bf16.mxu0 0
        %542 = vmatpush1.bf16.msra.mxu0 0
        %543 = vmatprep.subr.bf16.mxu0 0
        %544 = vmatpush1.bf16.msra.mxu0 0
        %545 = vmatprep.subr.bf16.mxu0 0
        %546 = vmatpush1.bf16.msra.mxu0 0
        %547 = vmatprep.mubr.bf16.mxu0 0
        %548 = vmatmul.mubr.bf16.gmra.mrb[0].mxu0 %v509
        %v549 = vpop.f32.mrb[0].mxu0
        %v550 = vadd.f32 %v495, %v549
        %v551 = vpop.f32.mrb[0].mxu0
        %v552 = vpop.f32.mrb[0].mxu0
        %v553 = vadd.f32 %v500, %v552
        %v554 = vpop.f32.mrb[0].mxu0
        %555 = vdwg.mxu0
        %v556 = vmul.f32 %v550, 0.5
        %v557 = vmul.f32 %v553, 0.5
        %v558 = vmul.f32 %v550, 0.70710677
        %v559 = vmul.f32 %v553, 0.70710677
        %v560 = verf.f32.pop %v558
        %v561 = verf.f32.pop %v559
        %v562 = vadd.f32 %v560, 1.0
        %v563 = vadd.f32 %v561, 1.0
        %v564 = vmul.f32 %v556, %v562
        %v565 = vmul.f32 %v557, %v563
        %v566 = vpack.c.bf16 %v565, %v564
        %568 = vset.pattern.permute.xlu0 0
        %569 = vperm.xlu0 %568, %v446
        %v570 = vpop.permute.xlu0 %569
        %vm572 = vcmask 130048
        %v574 = vsel %vm572, %v445, 0
        %576 = vmatprep.subr.bf16.mxu0 0
        %577 = vmatpush1.bf16.msra.mxu0 %v566
        %578 = vmatprep.subr.bf16.mxu0 0
        %579 = vmatpush1.bf16.msra.mxu0 0
        %580 = vmatprep.subr.bf16.mxu0 0
        %581 = vmatpush1.bf16.msra.mxu0 0
        %582 = vmatprep.subr.bf16.mxu0 0
        %583 = vmatpush1.bf16.msra.mxu0 0
        %584 = vmatprep.subr.bf16.mxu0 0
        %585 = vmatpush1.bf16.msra.mxu0 0
        %586 = vmatprep.subr.bf16.mxu0 0
        %587 = vmatpush1.bf16.msra.mxu0 0
        %588 = vmatprep.subr.bf16.mxu0 0
        %589 = vmatpush1.bf16.msra.mxu0 0
        %590 = vmatprep.subr.bf16.mxu0 0
        %591 = vmatpush1.bf16.msra.mxu0 0
        %592 = vmatprep.subr.bf16.mxu0 0
        %593 = vmatpush1.bf16.msra.mxu0 0
        %594 = vmatprep.subr.bf16.mxu0 0
        %595 = vmatpush1.bf16.msra.mxu0 0
        %596 = vmatprep.subr.bf16.mxu0 0
        %597 = vmatpush1.bf16.msra.mxu0 0
        %598 = vmatprep.subr.bf16.mxu0 0
        %599 = vmatpush1.bf16.msra.mxu0 0
        %600 = vmatprep.subr.bf16.mxu0 0
        %601 = vmatpush1.bf16.msra.mxu0 0
        %602 = vmatprep.subr.bf16.mxu0 0
        %603 = vmatpush1.bf16.msra.mxu0 0
        %604 = vmatprep.subr.bf16.mxu0 0
        %605 = vmatpush1.bf16.msra.mxu0 0
        %606 = vmatprep.subr.bf16.mxu0 0
        %607 = vmatpush1.bf16.msra.mxu0 0
        %608 = vmatprep.mubr.bf16.mxu0 0
        %609 = vmatmul.mubr.bf16.gmra.mrb[0].mxu0 %v574
        %v610 = vpop.f32.mrb[0].mxu0
        %v611 = vadd.f32 %v570, %v610
        %v612 = vpop.f32.mrb[0].mxu0
        %v613 = vpop.f32.mrb[0].mxu0
        %v614 = vpop.f32.mrb[0].mxu0
        %615 = vdwg.mxu0
        %v616 = vadd.f32 %v611, %v461
        %v617 = vsel %vm462, %v616, 0.0
        %618 = vadd.xlane.f32.xlu0 %v617
        %v619 = vpop.xlane.xlu0 %618
        %v620 = vmul.f32 %v619, %v466
        %v621 = vsub.f32 %v616, %v620
        %v622 = vmul.f32 %v621, %v621
        %v623 = vsel %vm462, %v622, 0.0
        %624 = vadd.xlane.f32.xlu0 %v623
        %v625 = vpop.xlane.xlu0 %624
        %v626 = vmul.f32 %v625, %v466
        %v627 = vadd.f32 %v626, 1e-05
        %v628 = vrsqrt.pop %v627
        %v629 = vmul.f32 %v621, %v628
        %v631 = vlaneseq
        %v632 = vshrl.u32 %v631, 7
        %v633 = vsub.s32 0, %v632
        %v634 = vrot.slane %v439, %v633
        %v636 = vmul.f32 %v629, %v634
        %v638 = vlaneseq
        %v639 = vshrl.u32 %v638, 7
        %v640 = vsub.s32 0, %v639
        %v641 = vrot.slane %v440, %v640
        %v643 = vadd.f32 %v636, %v641
        %v644 = vpack.c.bf16 %v643, %v643
        %v646 = vlaneseq
        %v647 = vshrl.u32 %v646, 7
        %v648 = vsub.s32 0, %v647
        %v649 = vrot.slane %v451, %v648
        %v655 = vunpack.c.l.b16 %v447
        %v656 = vunpack.c.l.b16 %v448
        %v657 = vunpack.c.l.b16 %v449
        %v658 = vunpack.c.l.b16 %v450
        %v659 = vpack.c.b16 %v656, %v655
        %v660 = vpack.c.b16 %v658, %v657
        %v664 = vsel %vm462, %v644, 0
        %666 = vmatprep.subr.bf16.mxu0 0
        %667 = vmatpush1.bf16.msra.mxu0 %v659
        %668 = vmatprep.subr.bf16.mxu0 0
        %669 = vmatpush1.bf16.msra.mxu0 %v660
        %670 = vmatprep.subr.bf16.mxu0 0
        %671 = vmatpush1.bf16.msra.mxu0 0
        %672 = vmatprep.subr.bf16.mxu0 0
        %673 = vmatpush1.bf16.msra.mxu0 0
        %674 = vmatprep.subr.bf16.mxu0 0
        %675 = vmatpush1.bf16.msra.mxu0 0
        %676 = vmatprep.subr.bf16.mxu0 0
        %677 = vmatpush1.bf16.msra.mxu0 0
        %678 = vmatprep.subr.bf16.mxu0 0
        %679 = vmatpush1.bf16.msra.mxu0 0
        %680 = vmatprep.subr.bf16.mxu0 0
        %681 = vmatpush1.bf16.msra.mxu0 0
        %682 = vmatprep.subr.bf16.mxu0 0
        %683 = vmatpush1.bf16.msra.mxu0 0
        %684 = vmatprep.subr.bf16.mxu0 0
        %685 = vmatpush1.bf16.msra.mxu0 0
        %686 = vmatprep.subr.bf16.mxu0 0
        %687 = vmatpush1.bf16.msra.mxu0 0
        %688 = vmatprep.subr.bf16.mxu0 0
        %689 = vmatpush1.bf16.msra.mxu0 0
        %690 = vmatprep.subr.bf16.mxu0 0
        %691 = vmatpush1.bf16.msra.mxu0 0
        %692 = vmatprep.subr.bf16.mxu0 0
        %693 = vmatpush1.bf16.msra.mxu0 0
        %694 = vmatprep.subr.bf16.mxu0 0
        %695 = vmatpush1.bf16.msra.mxu0 0
        %696 = vmatprep.subr.bf16.mxu0 0
        %697 = vmatpush1.bf16.msra.mxu0 0
        %698 = vmatprep.mubr.bf16.mxu0 0
        %699 = vmatmul.mubr.bf16.gmra.mrb[0].mxu0 %v664
        %v700 = vpop.f32.mrb[0].mxu0
        %v701 = vadd.f32 %v649, %v700
        %v702 = vpop.f32.mrb[0].mxu0
        %v703 = vpop.f32.mrb[0].mxu0
        %v704 = vpop.f32.mrb[0].mxu0
        %705 = vdwg.mxu0
        %v706 = vmul.f32 %v701, 0.5
        %v707 = vmul.f32 %v701, 0.70710677
        %v708 = verf.f32.pop %v707
        %v709 = vadd.f32 %v708, 1.0
        %v710 = vmul.f32 %v706, %v709
        %v711 = vpack.c.bf16 %v710, %v710
        %v713 = vlaneseq
        %v714 = vshrl.u32 %v713, 7
        %v715 = vsub.s32 0, %v714
        %v716 = vrot.slane %v460, %v715
        %v726 = vunpack.c.l.b16 %v452
        %v727 = vunpack.c.l.b16 %v453
        %v728 = vunpack.c.l.b16 %v454
        %v729 = vunpack.c.l.b16 %v455
        %v730 = vunpack.c.l.b16 %v456
        %v731 = vunpack.c.l.b16 %v457
        %v732 = vunpack.c.l.b16 %v458
        %v733 = vunpack.c.l.b16 %v459
        %v734 = vpack.c.b16 %v727, %v726
        %v735 = vpack.c.b16 %v729, %v728
        %v736 = vpack.c.b16 %v731, %v730
        %v737 = vpack.c.b16 %v733, %v732
        %vm742 = vcmask 523264
        %v744 = vsel %vm742, %v711, 0
        %746 = vmatprep.subr.bf16.mxu0 0
        %747 = vmatpush1.bf16.msra.mxu0 %v734
        %748 = vmatprep.subr.bf16.mxu0 0
        %749 = vmatpush1.bf16.msra.mxu0 %v735
        %750 = vmatprep.subr.bf16.mxu0 0
        %751 = vmatpush1.bf16.msra.mxu0 %v736
        %752 = vmatprep.subr.bf16.mxu0 0
        %753 = vmatpush1.bf16.msra.mxu0 %v737
        %754 = vmatprep.subr.bf16.mxu0 0
        %755 = vmatpush1.bf16.msra.mxu0 0
        %756 = vmatprep.subr.bf16.mxu0 0
        %757 = vmatpush1.bf16.msra.mxu0 0
        %758 = vmatprep.subr.bf16.mxu0 0
        %759 = vmatpush1.bf16.msra.mxu0 0
        %760 = vmatprep.subr.bf16.mxu0 0
        %761 = vmatpush1.bf16.msra.mxu0 0
        %762 = vmatprep.subr.bf16.mxu0 0
        %763 = vmatpush1.bf16.msra.mxu0 0
        %764 = vmatprep.subr.bf16.mxu0 0
        %765 = vmatpush1.bf16.msra.mxu0 0
        %766 = vmatprep.subr.bf16.mxu0 0
        %767 = vmatpush1.bf16.msra.mxu0 0
        %768 = vmatprep.subr.bf16.mxu0 0
        %769 = vmatpush1.bf16.msra.mxu0 0
        %770 = vmatprep.subr.bf16.mxu0 0
        %771 = vmatpush1.bf16.msra.mxu0 0
        %772 = vmatprep.subr.bf16.mxu0 0
        %773 = vmatpush1.bf16.msra.mxu0 0
        %774 = vmatprep.subr.bf16.mxu0 0
        %775 = vmatpush1.bf16.msra.mxu0 0
        %776 = vmatprep.subr.bf16.mxu0 0
        %777 = vmatpush1.bf16.msra.mxu0 0
        %778 = vmatprep.mubr.bf16.mxu0 0
        %779 = vmatmul.mubr.bf16.gmra.mrb[0].mxu0 %v744
        %v780 = vpop.f32.mrb[0].mxu0
        %v781 = vadd.f32 %v716, %v780
        %v782 = vpop.f32.mrb[0].mxu0
        %v783 = vpop.f32.mrb[0].mxu0
        %v784 = vpop.f32.mrb[0].mxu0
        %785 = vdwg.mxu0
        %v786 = vadd.f32 %v781, %v616
        %787 = vst.msk [vmem:[%s431] sm:$0xff] %vm462, %v786
        %s788 = sand.u32 %s313, 1
        %s789 = scalar_lea.sflag [#allocation3], %s788
        %s790 = sand.u32 %s313, 1
        %s791 = smul.addr %s790, 8
        %s792 = scalar_lea.vmem [#allocation2], %s791
        // Predicated region
        $region73: #{tpu_custom_call.1} parent=71 // pred_check
          %p793 = pneg %p323
        $region74: #{tpu_custom_call.1} parent=71 // pred_check_branch
          %795 = sbr.rel (%p793) target = $region76
        $region75: #{tpu_custom_call.1} parent=71 // pred_region
          %s797 = ssub.s32 128, 128
          %798 = vsyncadd %s789, %s797
          %s799 = smul.addr %s27, 128
          %s800 = scalar_lea.hbm %s13, %s799
          %s802 = sshll.u32 %s792, 4
          %s803 = int_to_ptr.vmem [resolvable:$true] %s802
          %805 = dma.vmem_to_hbm [thread:$0]  %s803, 128, %s800, %s789
        $region76: #{tpu_custom_call.1} parent=71 // pred_fallthru
          _
      $region72: #{tpu_custom_call.1} parent=5 // pred_fallthru
        _
      %p806 = scmp.le.s32.totalorder 2, %s22
      // Predicated region
      $region77: #{tpu_custom_call.1} parent=5 // pred_check
        %p807 = pneg %p806
      $region78: #{tpu_custom_call.1} parent=5 // pred_check_branch
        %809 = sbr.rel (%p807) target = $region80
      $region79: #{tpu_custom_call.1} parent=5 // pred_region
        %s810 = ssub.s32 %s22, 2
        // Predicated region
        $region81: #{tpu_custom_call.1} parent=79 // pred_check
          %p811 = pneg %p329
        $region82: #{tpu_custom_call.1} parent=79 // pred_check_branch
          %813 = sbr.rel (%p811) target = $region84
        $region83: #{tpu_custom_call.1} parent=79 // pred_region
          %s814 = sand.u32 %s314, 1
          %s815 = scalar_lea.sflag [#allocation3], %s814
          %s816 = sand.u32 %s314, 1
          %s817 = smul.addr %s816, 8
          %s818 = scalar_lea.vmem [#allocation2], %s817
          %819 = dma.done %s815, 128
        $region84: #{tpu_custom_call.1} parent=79 // pred_fallthru
          _
      $region80: #{tpu_custom_call.1} parent=5 // pred_fallthru
        _
    $region6: #{tpu_custom_call.1} parent=1 // loop_footer
      %s26 = sadd.s32 1, %s22
    $region7: #{tpu_custom_call.1} parent=1 // loop_footer_branch
      %21 = sbr.rel target = $region3
    $region8: #{tpu_custom_call.1} parent=1 // loop_exit
      _
    %820 = vsyncpa [#allocation3], 1
    %s821 = scalar_lea.sflag [#allocation3], 1
    %822 = vsyncpa %s821, 1

</llo_original>
